<compile_context>
chip_gen: v7x
topology: tpu7x:2x2x1
jax: 0.10.0
libtpu: 0.0.40
codegen_flags: <defaults>
</compile_context>

<pallas_src>
import jax
import jax.numpy as jnp
from jax.experimental import pallas as pl
from jax.experimental.pallas import tpu as pltpu


# --------------------------------------------------------------------------- #
# Kernel
# --------------------------------------------------------------------------- #
def _make_fcomb_kernel(n_relu_layers):
    """Fused channel-major 1x1-conv chain.

    Ref layout:
      refs[0]   : feature-map tile            (1, C, T)      streamed dtype (bf16)
      refs[1]   : per-batch first bias w/ z   (1, hidden0, 1) f32
      refs[2]   : W1_f^T                      (hidden0, C)    streamed dtype (bf16)
      refs[3:-1]: (W^T, b_col) pairs, remaining relu layers then last layer (f32)
      refs[-1]  : output tile                 (1, num_classes, T)
    """

    def kernel(*refs):
        fmap_ref = refs[0]
        zb1_ref = refs[1]
        w1_ref = refs[2]
        rest = refs[3:-1]
        out_ref = refs[-1]

        # bf16 straight into the MXU; accumulation is f32 via preferred_element_type.
        x = fmap_ref[0]                                             # (C, T)
        h = jnp.dot(w1_ref[...], x, preferred_element_type=jnp.float32)
        h = jnp.maximum(h + zb1_ref[0], 0.0)                        # f32 (hidden0, T)

        # Remaining hidden 1x1 convs + ReLU (h stays f32; weights tiny, kept f32).
        for li in range(n_relu_layers - 1):
            w = rest[2 * li][...]
            b = rest[2 * li + 1][...]
            h = jnp.dot(w, h, preferred_element_type=jnp.float32) + b
            h = jnp.maximum(h, 0.0)

        # Last 1x1 conv (no activation).
        wl = rest[-2][...]
        bl = rest[-1][...]
        out = jnp.dot(wl, h, preferred_element_type=jnp.float32) + bl
        out_ref[0] = out.astype(out_ref.dtype)                      # (num_classes, T)

    return kernel


# --------------------------------------------------------------------------- #
# Tile / VMEM sizing helpers
# --------------------------------------------------------------------------- #
def _round_up(x, m):
    return ((x + m - 1) // m) * m


def _vmem_capacity_bytes():
    """Physical VMEM of the local chip; assume the smallest (64 MiB) if unknown."""
    try:
        info = pltpu.get_tpu_info()
        cap = getattr(info, "vmem_capacity_bytes", None)
        if cap:
            return int(cap)
    except Exception:
        pass
    return 64 * 1024 * 1024


def _derive_tile_hw(hw, n_batch, per_pixel_bytes, tile_hw_max, vmem_budget):
    """Largest spatial tile that fits the VMEM budget, multiple of 128 lanes."""
    tile = vmem_budget // per_pixel_bytes
    tile = min(tile, tile_hw_max)
    tile = max(128, (tile // 128) * 128)
    if hw <= tile:
        tile = hw  # single full-extent block: always a legal lane dimension
    # Megacore: keep at least 2 grid steps so both TensorCores have work (v7x).
    while n_batch * (-(-hw // tile)) < 2 and tile > 128:
        tile = max(128, ((tile // 2) // 128) * 128)
    return tile


# --------------------------------------------------------------------------- #
# Forward
# --------------------------------------------------------------------------- #
def fcomb_forward(feature_map, z, weights, biases, *,
                  compute_dtype=jnp.bfloat16, tile_hw_max=32768):
    """Pallas implementation of Fcomb.forward.

    feature_map: (B, C, H, W) NCHW (f32 or bf16)
    z          : (B, latent_dim)
    weights    : list of (C_in, C_out) matrices (1x1 conv kernels, transposed)
    biases     : list of (1, C_out) bias rows
    """
    B, C, H, W = feature_map.shape
    hidden0 = weights[0].shape[1]
    num_classes = weights[-1].shape[1]
    HW = H * W
    out_dtype = feature_map.dtype

    # ---- tiny precompute in plain JAX, all f32 (do NOT quantize biases/z) ---
    w1 = weights[0].astype(jnp.float32)                 # (C + latent, hidden0)
    w1_f, w1_z = w1[:C, :], w1[C:, :]
    b1 = biases[0].reshape(1, hidden0).astype(jnp.float32)
    zb1 = (z.astype(jnp.float32) @ w1_z + b1).reshape(B, hidden0, 1)

    # Only the *streamed* first-matmul operands go bf16; h stays f32 so the
    # remaining (tiny) weights stay f32 to avoid a pointless round-trip.
    w1_ft = jnp.transpose(w1_f).astype(compute_dtype)   # (hidden0, C)
    wts = [jnp.transpose(w).astype(jnp.float32) for w in weights[1:]]
    bcols = [b.reshape(-1, 1).astype(jnp.float32) for b in biases[1:]]

    # NCHW stays NCHW: (B, C, H, W) -> (B, C, H*W) is a contiguous reshape.
    fmap3 = feature_map.reshape(B, C, HW)
    if fmap3.dtype != compute_dtype:
        # TODO(synk): have the upstream producer emit bf16 directly so this
        # extra HBM cast pass disappears in end-to-end use.
        fmap3 = fmap3.astype(compute_dtype)

    in_bytes = fmap3.dtype.itemsize
    out_bytes = jnp.zeros((), out_dtype).dtype.itemsize

    vmem_cap = _vmem_capacity_bytes()
    # 48 MiB budget on a 64-MiB part (v7x), 96 MiB on 128-MiB parts (v5e/v6e).
    vmem_budget = min(int(0.75 * vmem_cap), 96 * 1024 * 1024)

    # VMEM bytes per spatial pixel of one tile:
    #   double-buffered fmap + double-buffered output + f32 intermediates.
    per_pixel = (2 * C * in_bytes
                 + 2 * num_classes * out_bytes
                 + 3 * hidden0 * 4
                 + num_classes * 4)
    tile_hw = _derive_tile_hw(HW, B, per_pixel, tile_hw_max, vmem_budget)
    grid = (B, pl.cdiv(HW, tile_hw))     # ragged last tile handled by Pallas

    n_relu_layers = len(weights) - 1
    kernel = _make_fcomb_kernel(n_relu_layers)

    def build_and_run(single_buffer_consts):
        def const_spec(arr):
            nd = arr.ndim
            idx = lambda b, t, _nd=nd: (0,) * _nd
            if single_buffer_consts:
                # Constant across the grid -> single buffer frees VMEM headroom.
                return pl.BlockSpec(arr.shape, idx, pipeline_mode=pl.Buffered(1))
            return pl.BlockSpec(arr.shape, idx)

        in_specs = [
            pl.BlockSpec((1, C, tile_hw), lambda b, t: (b, 0, t)),
            pl.BlockSpec((1, hidden0, 1), lambda b, t: (b, 0, 0)),
            const_spec(w1_ft),
        ]
        operands = [fmap3, zb1, w1_ft]
        for w_mat, b_col in zip(wts, bcols):
            in_specs.append(const_spec(w_mat))
            operands.append(w_mat)
            in_specs.append(const_spec(b_col))
            operands.append(b_col)

        call = pl.pallas_call(
            kernel,
            out_shape=jax.ShapeDtypeStruct((B, num_classes, HW), out_dtype),
            grid_spec=pltpu.PrefetchScalarGridSpec(
                num_scalar_prefetch=0,
                grid=grid,
                in_specs=in_specs,
                out_specs=pl.BlockSpec((1, num_classes, tile_hw),
                                       lambda b, t: (b, 0, t)),
            ),
            compiler_params=pltpu.CompilerParams(
                dimension_semantics=("parallel", "parallel"),
                vmem_limit_bytes=int(vmem_budget),
            ),
        )
        return call(*operands)

    try:
        out3 = build_and_run(True)
    except Exception:
        # Fallback for jax versions without pipeline_mode on BlockSpec.
        out3 = build_and_run(False)

    # (B, num_classes, H*W) -> (B, num_classes, H, W): contiguous reshape only.
    return out3.reshape(B, num_classes, H, W)


# --------------------------------------------------------------------------- #
# Params + reference
# --------------------------------------------------------------------------- #
def init_fcomb_params(key, num_filters0, latent_dim, num_classes, no_convs_fcomb):
    """Deterministic synthetic init matching the shapes of Fcomb.__init__."""
    dims = [num_filters0 + latent_dim]               # first conv input
    dims += [num_filters0] * (no_convs_fcomb - 1)    # relu-layer widths
    dims += [num_classes]                            # last_layer output

    weights, biases = [], []
    for li in range(len(dims) - 1):
        ci, co = dims[li], dims[li + 1]
        key, wk, bk = jax.random.split(key, 3)
        scale = 1.0 / jnp.sqrt(jnp.float32(ci))
        weights.append(jax.random.normal(wk, (ci, co), jnp.float32) * scale)
        biases.append(jax.random.normal(bk, (1, co), jnp.float32) * 0.01)
    return weights, biases


def fcomb_reference(feature_map, z, weights, biases):
    """Plain-JAX f32 reference (same math as the PyTorch forward)."""
    B, C, H, W = feature_map.shape
    latent_dim = z.shape[1]
    fmap_flat = jnp.transpose(feature_map.astype(jnp.float32),
                              (0, 2, 3, 1)).reshape(B * H * W, C)
    z_flat = jnp.broadcast_to(z.astype(jnp.float32)[:, None, None, :],
                              (B, H, W, latent_dim)).reshape(B * H * W, latent_dim)
    h = jnp.concatenate([fmap_flat, z_flat], axis=-1)
    for w_mat, b_row in zip(weights[:-1], biases[:-1]):
        h = jnp.maximum(h @ w_mat + b_row, 0.0)
    out = h @ weights[-1] + biases[-1]
    nc = weights[-1].shape[1]
    return jnp.transpose(out.reshape(B, H, W, nc), (0, 3, 1, 2))


# --------------------------------------------------------------------------- #
# Demo / validation
# --------------------------------------------------------------------------- #
if __name__ == "__main__":
    B, H, W = 2, 16, 16
    num_filters = [32]       # num_filters[0] used by Fcomb
    latent_dim = 8
    num_classes = 4
    no_convs_fcomb = 3       # first conv + 1 intermediate conv (ReLU) + last_layer

    key = jax.random.PRNGKey(0)
    key, kf, kz = jax.random.split(key, 3)
    # bf16 feature map: matches the streamed compute dtype (no extra cast pass).
    feature_map = jax.random.normal(
        kf, (B, num_filters[0], H, W), jnp.float32).astype(jnp.bfloat16)
    z = jax.random.normal(kz, (B, latent_dim), jnp.float32)

    weights, biases = init_fcomb_params(
        key, num_filters[0], latent_dim, num_classes, no_convs_fcomb)

    out = fcomb_forward(feature_map, z, weights, biases)
    out = jax.block_until_ready(out)
    ref = fcomb_reference(feature_map, z, weights, biases)
    assert out.shape == (B, num_classes, H, W), out.shape
    err = float(jnp.max(jnp.abs(out.astype(jnp.float32) - ref)))
    assert err < 5e-2, f"max abs err {err}"

    # Ragged spatial size (H*W not a multiple of 128) with a small forced tile:
    # exercises grid = cdiv(HW, tile) + partial last block write-back.
    H2, W2 = 10, 13
    key, kf2, kz2 = jax.random.split(key, 3)
    fm2 = jax.random.normal(
        kf2, (B, num_filters[0], H2, W2), jnp.float32).astype(jnp.bfloat16)
    z2 = jax.random.normal(kz2, (B, latent_dim), jnp.float32)
    out2 = jax.block_until_ready(
        fcomb_forward(fm2, z2, weights, biases, tile_hw_max=128))
    ref2 = fcomb_reference(fm2, z2, weights, biases)
    assert out2.shape == (B, num_classes, H2, W2), out2.shape
    err2 = float(jnp.max(jnp.abs(out2.astype(jnp.float32) - ref2)))
    assert err2 < 5e-2, f"max abs err {err2}"

    print("KERNEL_OK")
</pallas_src>

<mosaic_0001>
module attributes {stable_mosaic.version = 11 : i64} {
  func.func @kernel(%arg0: i32, %arg1: i32, %arg2: memref<1x32x256xbf16, #tpu.memory_space<vmem>>, %arg3: memref<1x32x1xf32, #tpu.memory_space<vmem>>, %arg4: memref<32x32xbf16, #tpu.memory_space<vmem>>, %arg5: memref<32x32xf32, #tpu.memory_space<vmem>>, %arg6: memref<32x1xf32, #tpu.memory_space<vmem>>, %arg7: memref<4x32xf32, #tpu.memory_space<vmem>>, %arg8: memref<4x1xf32, #tpu.memory_space<vmem>>, %arg9: memref<1x4x256xbf16, #tpu.memory_space<vmem>>) attributes {dimension_semantics = [#tpu.dimension_semantics<parallel>, #tpu.dimension_semantics<parallel>], iteration_bounds = array<i64: 2, 1>, scalar_prefetch = 0 : i64, scratch_operands = 0 : i64, tpu.core_type = #tpu.core_type<tc>, window_params = [{transform_indices = @transform_0, window_bounds = array<i64: 1, 32, 256>}, {transform_indices = @transform_1, window_bounds = array<i64: 1, 32, 1>}, {pipeline_mode = #tpu.pipeline_mode<synchronous>, transform_indices = @transform_2, window_bounds = array<i64: 32, 32>}, {pipeline_mode = #tpu.pipeline_mode<synchronous>, transform_indices = @transform_3, window_bounds = array<i64: 32, 32>}, {pipeline_mode = #tpu.pipeline_mode<synchronous>, transform_indices = @transform_4, window_bounds = array<i64: 32, 1>}, {pipeline_mode = #tpu.pipeline_mode<synchronous>, transform_indices = @transform_5, window_bounds = array<i64: 4, 32>}, {pipeline_mode = #tpu.pipeline_mode<synchronous>, transform_indices = @transform_6, window_bounds = array<i64: 4, 1>}, {transform_indices = @transform_7, window_bounds = array<i64: 1, 4, 256>}]} {
    %c0 = arith.constant 0 : index
    %c0_0 = arith.constant 0 : index
    %c0_1 = arith.constant 0 : index
    %0 = vector.load %arg2[%c0, %c0_0, %c0_1] : memref<1x32x256xbf16, #tpu.memory_space<vmem>>, vector<1x32x256xbf16>
    %1 = vector.shape_cast %0 : vector<1x32x256xbf16> to vector<32x256xbf16>
    %c0_2 = arith.constant 0 : index
    %c0_3 = arith.constant 0 : index
    %2 = vector.load %arg4[%c0_2, %c0_3] : memref<32x32xbf16, #tpu.memory_space<vmem>>, vector<32x32xbf16>
    %cst = arith.constant dense<0.000000e+00> : vector<32x256xf32>
    %3 = tpu.matmul %2, %1, %cst {dimension_numbers = #tpu.dot_dimension_numbers<[1], [0], [0], [1], [0, 0, 1, 1], [], []>} : vector<32x32xbf16>, vector<32x256xbf16>, vector<32x256xf32> -> vector<32x256xf32>
    %c0_4 = arith.constant 0 : index
    %c0_5 = arith.constant 0 : index
    %c0_6 = arith.constant 0 : index
    %4 = vector.load %arg3[%c0_4, %c0_5, %c0_6] : memref<1x32x1xf32, #tpu.memory_space<vmem>>, vector<1x32x1xf32>
    %5 = vector.shape_cast %4 : vector<1x32x1xf32> to vector<32x1xf32>
    %6 = vector.broadcast %5 : vector<32x1xf32> to vector<32x256xf32>
    %7 = arith.addf %3, %6 : vector<32x256xf32>
    %cst_7 = arith.constant 0.000000e+00 : f32
    %8 = vector.broadcast %cst_7 : f32 to vector<32x256xf32>
    %9 = arith.maximumf %7, %8 : vector<32x256xf32>
    %c0_8 = arith.constant 0 : index
    %c0_9 = arith.constant 0 : index
    %10 = vector.load %arg5[%c0_8, %c0_9] : memref<32x32xf32, #tpu.memory_space<vmem>>, vector<32x32xf32>
    %c0_10 = arith.constant 0 : index
    %c0_11 = arith.constant 0 : index
    %11 = vector.load %arg6[%c0_10, %c0_11] : memref<32x1xf32, #tpu.memory_space<vmem>>, vector<32x1xf32>
    %cst_12 = arith.constant dense<0.000000e+00> : vector<32x256xf32>
    %12 = tpu.matmul %10, %9, %cst_12 {dimension_numbers = #tpu.dot_dimension_numbers<[1], [0], [0], [1], [0, 0, 1, 1], [], []>} : vector<32x32xf32>, vector<32x256xf32>, vector<32x256xf32> -> vector<32x256xf32>
    %13 = vector.broadcast %11 : vector<32x1xf32> to vector<32x256xf32>
    %14 = arith.addf %12, %13 : vector<32x256xf32>
    %cst_13 = arith.constant 0.000000e+00 : f32
    %15 = vector.broadcast %cst_13 : f32 to vector<32x256xf32>
    %16 = arith.maximumf %14, %15 : vector<32x256xf32>
    %c0_14 = arith.constant 0 : index
    %c0_15 = arith.constant 0 : index
    %17 = vector.load %arg7[%c0_14, %c0_15] : memref<4x32xf32, #tpu.memory_space<vmem>>, vector<4x32xf32>
    %c0_16 = arith.constant 0 : index
    %c0_17 = arith.constant 0 : index
    %18 = vector.load %arg8[%c0_16, %c0_17] : memref<4x1xf32, #tpu.memory_space<vmem>>, vector<4x1xf32>
    %cst_18 = arith.constant dense<0.000000e+00> : vector<4x256xf32>
    %19 = tpu.matmul %17, %16, %cst_18 {dimension_numbers = #tpu.dot_dimension_numbers<[1], [0], [0], [1], [0, 0, 1, 1], [], []>} : vector<4x32xf32>, vector<32x256xf32>, vector<4x256xf32> -> vector<4x256xf32>
    %20 = vector.broadcast %18 : vector<4x1xf32> to vector<4x256xf32>
    %21 = arith.addf %19, %20 : vector<4x256xf32>
    %22 = arith.truncf %21 : vector<4x256xf32> to vector<4x256xbf16>
    %c0_19 = arith.constant 0 : index
    %c0_20 = arith.constant 0 : index
    %c0_21 = arith.constant 0 : index
    %23 = vector.load %arg9[%c0_19, %c0_20, %c0_21] : memref<1x4x256xbf16, #tpu.memory_space<vmem>>, vector<1x4x256xbf16>
    %24 = vector.shape_cast %23 : vector<1x4x256xbf16> to vector<4x256xbf16>
    %25 = vector.shape_cast %22 : vector<4x256xbf16> to vector<1x4x256xbf16>
    tpu.vector_store %arg9[%c0_19, %c0_20, %c0_21], %25 {strides = array<i32>} : memref<1x4x256xbf16, #tpu.memory_space<vmem>>, vector<1x4x256xbf16>,
    return
  }
  func.func @transform_0(%arg0: i32, %arg1: i32) -> (i32, i32, i32) {
    %c0_i32 = arith.constant 0 : i32
    %c0_i32_0 = arith.constant 0 : i32
    return %arg0, %c0_i32, %arg1 : i32, i32, i32
  }
  func.func @transform_1(%arg0: i32, %arg1: i32) -> (i32, i32, i32) {
    %c0_i32 = arith.constant 0 : i32
    %c0_i32_0 = arith.constant 0 : i32
    %c0_i32_1 = arith.constant 0 : i32
    return %arg0, %c0_i32, %c0_i32_0 : i32, i32, i32
  }
  func.func @transform_2(%arg0: i32, %arg1: i32) -> (i32, i32) {
    %c0_i32 = arith.constant 0 : i32
    %c0_i32_0 = arith.constant 0 : i32
    %c0_i32_1 = arith.constant 0 : i32
    return %c0_i32, %c0_i32_0 : i32, i32
  }
  func.func @transform_3(%arg0: i32, %arg1: i32) -> (i32, i32) {
    %c0_i32 = arith.constant 0 : i32
    %c0_i32_0 = arith.constant 0 : i32
    %c0_i32_1 = arith.constant 0 : i32
    return %c0_i32, %c0_i32_0 : i32, i32
  }
  func.func @transform_4(%arg0: i32, %arg1: i32) -> (i32, i32) {
    %c0_i32 = arith.constant 0 : i32
    %c0_i32_0 = arith.constant 0 : i32
    %c0_i32_1 = arith.constant 0 : i32
    return %c0_i32, %c0_i32_0 : i32, i32
  }
  func.func @transform_5(%arg0: i32, %arg1: i32) -> (i32, i32) {
    %c0_i32 = arith.constant 0 : i32
    %c0_i32_0 = arith.constant 0 : i32
    %c0_i32_1 = arith.constant 0 : i32
    return %c0_i32, %c0_i32_0 : i32, i32
  }
  func.func @transform_6(%arg0: i32, %arg1: i32) -> (i32, i32) {
    %c0_i32 = arith.constant 0 : i32
    %c0_i32_0 = arith.constant 0 : i32
    %c0_i32_1 = arith.constant 0 : i32
    return %c0_i32, %c0_i32_0 : i32, i32
  }
  func.func @transform_7(%arg0: i32, %arg1: i32) -> (i32, i32, i32) {
    %c0_i32 = arith.constant 0 : i32
    %c0_i32_0 = arith.constant 0 : i32
    return %arg0, %c0_i32, %arg1 : i32, i32, i32
  }
}

module attributes {stable_mosaic.version = 11 : i64} {
  func.func @kernel(%arg0: i32, %arg1: i32, %arg2: memref<1x32x256xbf16, #tpu.memory_space<vmem>>, %arg3: memref<1x32x1xf32, #tpu.memory_space<vmem>>, %arg4: memref<32x32xbf16, #tpu.memory_space<vmem>>, %arg5: memref<32x32xf32, #tpu.memory_space<vmem>>, %arg6: memref<32x1xf32, #tpu.memory_space<vmem>>, %arg7: memref<4x32xf32, #tpu.memory_space<vmem>>, %arg8: memref<4x1xf32, #tpu.memory_space<vmem>>, %arg9: memref<1x4x256xbf16, #tpu.memory_space<vmem>>) attributes {dimension_semantics = [#tpu.dimension_semantics<parallel>, #tpu.dimension_semantics<parallel>], iteration_bounds = array<i64: 2, 1>, scalar_prefetch = 0 : i64, scratch_operands = 0 : i64, tpu.core_type = #tpu.core_type<tc>, window_params = [{transform_indices = @transform_0, window_bounds = array<i64: 1, 32, 256>}, {transform_indices = @transform_1, window_bounds = array<i64: 1, 32, 1>}, {pipeline_mode = #tpu.pipeline_mode<synchronous>, transform_indices = @transform_2, window_bounds = array<i64: 32, 32>}, {pipeline_mode = #tpu.pipeline_mode<synchronous>, transform_indices = @transform_3, window_bounds = array<i64: 32, 32>}, {pipeline_mode = #tpu.pipeline_mode<synchronous>, transform_indices = @transform_4, window_bounds = array<i64: 32, 1>}, {pipeline_mode = #tpu.pipeline_mode<synchronous>, transform_indices = @transform_5, window_bounds = array<i64: 4, 32>}, {pipeline_mode = #tpu.pipeline_mode<synchronous>, transform_indices = @transform_6, window_bounds = array<i64: 4, 1>}, {transform_indices = @transform_7, window_bounds = array<i64: 1, 4, 256>}]} {
    %c0 = arith.constant 0 : index
    %c0_0 = arith.constant 0 : index
    %c0_1 = arith.constant 0 : index
    %0 = vector.load %arg2[%c0, %c0_0, %c0_1] : memref<1x32x256xbf16, #tpu.memory_space<vmem>>, vector<1x32x256xbf16>
    %1 = vector.shape_cast %0 : vector<1x32x256xbf16> to vector<32x256xbf16>
    %c0_2 = arith.constant 0 : index
    %c0_3 = arith.constant 0 : index
    %2 = vector.load %arg4[%c0_2, %c0_3] : memref<32x32xbf16, #tpu.memory_space<vmem>>, vector<32x32xbf16>
    %cst = arith.constant dense<0.000000e+00> : vector<32x256xf32>
    %3 = tpu.matmul %2, %1, %cst {dimension_numbers = #tpu.dot_dimension_numbers<[1], [0], [0], [1], [0, 0, 1, 1], [], []>} : vector<32x32xbf16>, vector<32x256xbf16>, vector<32x256xf32> -> vector<32x256xf32>
    %c0_4 = arith.constant 0 : index
    %c0_5 = arith.constant 0 : index
    %c0_6 = arith.constant 0 : index
    %4 = vector.load %arg3[%c0_4, %c0_5, %c0_6] : memref<1x32x1xf32, #tpu.memory_space<vmem>>, vector<1x32x1xf32>
    %5 = vector.shape_cast %4 : vector<1x32x1xf32> to vector<32x1xf32>
    %6 = vector.broadcast %5 : vector<32x1xf32> to vector<32x256xf32>
    %7 = arith.addf %3, %6 : vector<32x256xf32>
    %cst_7 = arith.constant 0.000000e+00 : f32
    %8 = vector.broadcast %cst_7 : f32 to vector<32x256xf32>
    %9 = arith.maximumf %7, %8 : vector<32x256xf32>
    %c0_8 = arith.constant 0 : index
    %c0_9 = arith.constant 0 : index
    %10 = vector.load %arg5[%c0_8, %c0_9] : memref<32x32xf32, #tpu.memory_space<vmem>>, vector<32x32xf32>
    %c0_10 = arith.constant 0 : index
    %c0_11 = arith.constant 0 : index
    %11 = vector.load %arg6[%c0_10, %c0_11] : memref<32x1xf32, #tpu.memory_space<vmem>>, vector<32x1xf32>
    %cst_12 = arith.constant dense<0.000000e+00> : vector<32x256xf32>
    %12 = tpu.matmul %10, %9, %cst_12 {dimension_numbers = #tpu.dot_dimension_numbers<[1], [0], [0], [1], [0, 0, 1, 1], [], []>} : vector<32x32xf32>, vector<32x256xf32>, vector<32x256xf32> -> vector<32x256xf32>
    %13 = vector.broadcast %11 : vector<32x1xf32> to vector<32x256xf32>
    %14 = arith.addf %12, %13 : vector<32x256xf32>
    %cst_13 = arith.constant 0.000000e+00 : f32
    %15 = vector.broadcast %cst_13 : f32 to vector<32x256xf32>
    %16 = arith.maximumf %14, %15 : vector<32x256xf32>
    %c0_14 = arith.constant 0 : index
    %c0_15 = arith.constant 0 : index
    %17 = vector.load %arg7[%c0_14, %c0_15] : memref<4x32xf32, #tpu.memory_space<vmem>>, vector<4x32xf32>
    %c0_16 = arith.constant 0 : index
    %c0_17 = arith.constant 0 : index
    %18 = vector.load %arg8[%c0_16, %c0_17] : memref<4x1xf32, #tpu.memory_space<vmem>>, vector<4x1xf32>
    %cst_18 = arith.constant dense<0.000000e+00> : vector<4x256xf32>
    %19 = tpu.matmul %17, %16, %cst_18 {dimension_numbers = #tpu.dot_dimension_numbers<[1], [0], [0], [1], [0, 0, 1, 1], [], []>} : vector<4x32xf32>, vector<32x256xf32>, vector<4x256xf32> -> vector<4x256xf32>
    %20 = vector.broadcast %18 : vector<4x1xf32> to vector<4x256xf32>
    %21 = arith.addf %19, %20 : vector<4x256xf32>
    %22 = arith.truncf %21 : vector<4x256xf32> to vector<4x256xbf16>
    %c0_19 = arith.constant 0 : index
    %c0_20 = arith.constant 0 : index
    %c0_21 = arith.constant 0 : index
    %23 = vector.load %arg9[%c0_19, %c0_20, %c0_21] : memref<1x4x256xbf16, #tpu.memory_space<vmem>>, vector<1x4x256xbf16>
    %24 = vector.shape_cast %23 : vector<1x4x256xbf16> to vector<4x256xbf16>
    %25 = vector.shape_cast %22 : vector<4x256xbf16> to vector<1x4x256xbf16>
    tpu.vector_store %arg9[%c0_19, %c0_20, %c0_21], %25 {strides = array<i32>} : memref<1x4x256xbf16, #tpu.memory_space<vmem>>, vector<1x4x256xbf16>,
    return
  }
  func.func @transform_0(%arg0: i32, %arg1: i32) -> (i32, i32, i32) {
    %c0_i32 = arith.constant 0 : i32
    %c0_i32_0 = arith.constant 0 : i32
    return %arg0, %c0_i32, %arg1 : i32, i32, i32
  }
  func.func @transform_1(%arg0: i32, %arg1: i32) -> (i32, i32, i32) {
    %c0_i32 = arith.constant 0 : i32
    %c0_i32_0 = arith.constant 0 : i32
    %c0_i32_1 = arith.constant 0 : i32
    return %arg0, %c0_i32, %c0_i32_0 : i32, i32, i32
  }
  func.func @transform_2(%arg0: i32, %arg1: i32) -> (i32, i32) {
    %c0_i32 = arith.constant 0 : i32
    %c0_i32_0 = arith.constant 0 : i32
    %c0_i32_1 = arith.constant 0 : i32
    return %c0_i32, %c0_i32_0 : i32, i32
  }
  func.func @transform_3(%arg0: i32, %arg1: i32) -> (i32, i32) {
    %c0_i32 = arith.constant 0 : i32
    %c0_i32_0 = arith.constant 0 : i32
    %c0_i32_1 = arith.constant 0 : i32
    return %c0_i32, %c0_i32_0 : i32, i32
  }
  func.func @transform_4(%arg0: i32, %arg1: i32) -> (i32, i32) {
    %c0_i32 = arith.constant 0 : i32
    %c0_i32_0 = arith.constant 0 : i32
    %c0_i32_1 = arith.constant 0 : i32
    return %c0_i32, %c0_i32_0 : i32, i32
  }
  func.func @transform_5(%arg0: i32, %arg1: i32) -> (i32, i32) {
    %c0_i32 = arith.constant 0 : i32
    %c0_i32_0 = arith.constant 0 : i32
    %c0_i32_1 = arith.constant 0 : i32
    return %c0_i32, %c0_i32_0 : i32, i32
  }
  func.func @transform_6(%arg0: i32, %arg1: i32) -> (i32, i32) {
    %c0_i32 = arith.constant 0 : i32
    %c0_i32_0 = arith.constant 0 : i32
    %c0_i32_1 = arith.constant 0 : i32
    return %c0_i32, %c0_i32_0 : i32, i32
  }
  func.func @transform_7(%arg0: i32, %arg1: i32) -> (i32, i32, i32) {
    %c0_i32 = arith.constant 0 : i32
    %c0_i32_0 = arith.constant 0 : i32
    return %arg0, %c0_i32, %arg1 : i32, i32, i32
  }
}

</mosaic_0001>

<llo_original>
// kernel: tpu_custom_call.1
$region0: #{tpu_custom_call.1}
  #allocation0 [shape = 'u32[]', space=smem, size = 0x4, offset = 0x4, fixed_abs, tag = 'smem constant byte address 0x4 - core index']
  #allocation1 [shape = 'u32[144,128]{1,0:T(1,128)}', space=vmem, size = 0x12000, scoped, tag = 'internal scratch']
  %s0 = inlined_call_operand.vmem [shape: bf16[2,32,256], index: 0, kind: input, shape index: {}]
  %s1 = inlined_call_operand.vmem [shape: f32[2,32,1], index: 1, kind: input, shape index: {}]
  %s2 = inlined_call_operand.hbm [shape: bf16[32,32], index: 2, kind: input, shape index: {}]
  %s3 = inlined_call_operand.vmem [shape: f32[32,32], index: 3, kind: input, shape index: {}]
  %s4 = inlined_call_operand.vmem [shape: f32[32,1], index: 4, kind: input, shape index: {}]
  %s5 = inlined_call_operand.vmem [shape: f32[4,32], index: 5, kind: input, shape index: {}]
  %s6 = inlined_call_operand.vmem [shape: f32[4,1], index: 6, kind: input, shape index: {}]
  %s7 = inlined_call_operand.hbm [shape: bf16[2,4,256], index: 7, kind: output, shape index: {}]
  %s8 = sld [smem:[#allocation0]]
  $region65: #{tpu_custom_call.1} parent=0
    _
  %s10 = ssub.s32 1, %s8
  %s11 = scalar_select 0, %s10, %s8
  $region1: #{tpu_custom_call.1} parent=0
    #allocation2 [shape = 'u8[8192]{0}', space=vmem, size = 0x2000, scoped, tag = 'input window, operand 2, single buffered']
    #allocation3 [shape = 's32[2]{0}', space=sflag, size = 0x8, scoped, tag = 'scoped memory for tpu_custom_call.1']
    #allocation4 [shape = 's32[2]{0}', space=sflag, size = 0x8, scoped, tag = 'scoped memory for tpu_custom_call.1']
    #allocation5 [shape = 'u8[4096]{0}', space=vmem, size = 0x1000, scoped, tag = 'output window, operand 0']
    %12 = vsyncpa [#allocation3], 0
    %13 = vsyncpa [#allocation4], 0
    %s14 = scalar_lea.sflag [#allocation4], 1
    %15 = vsyncpa %s14, 0
    loop: start=0, step=1, limit=4
    $region2: #{tpu_custom_call.1} parent=1 // loop_pre_header
      _
    $region3: #{tpu_custom_call.1} parent=1 // loop_header
      %s17 = sphi 0, %s21
      %p18 = scmp.ge.s32.totalorder %s17, 4
      %s24 = sphi 0, %s36
      %s25 = sphi 0, %s32
      %s26 = sphi 0, %s24
      %s27 = sphi 0, %s25
      %s28 = sphi 0, %s26
      %s29 = sphi 0, %s27
      %s41 = sphi 0, %s43
      %s44 = sphi 0, %s41
      %s45 = sphi 0, %s44
      %s61 = sphi 0, %s45
      %s67 = sphi 0, %s69
      %s70 = sphi 0, %s67
      %s71 = sphi 0, %s70
      %s87 = sphi 0, %s71
      %s91 = sphi 0, %s91
      %s93 = sphi 0, %s91
      %s94 = sphi 0, %s93
      %s108 = sphi 0, %s94
      %s112 = sphi 0, %s112
      %s114 = sphi 0, %s112
      %s115 = sphi 0, %s114
      %s129 = sphi 0, %s115
      %s133 = sphi 0, %s133
      %s135 = sphi 0, %s133
      %s136 = sphi 0, %s135
      %s150 = sphi 0, %s136
      %s154 = sphi 0, %s154
      %s156 = sphi 0, %s154
      %s157 = sphi 0, %s156
      %s171 = sphi 0, %s157
      %s175 = sphi 0, %s175
      %s177 = sphi 0, %s175
      %s178 = sphi 0, %s177
      %s192 = sphi 0, %s178
      %s200 = sphi 0, %s202
      %s203 = sphi 0, %s200
      %s204 = sphi 0, %s203
      %s220 = sphi 0, %s204
    $region4: #{tpu_custom_call.1} parent=1 // loop_header_branch
      %20 = sbr.rel (%p18) target = $region8
    $region5: #{tpu_custom_call.1} parent=1 // loop_body
      %s22 = ssub.s32 %s17, 1
      %s23 = ssub.s32 %s17, 2
      %s30 = sadd.s32 1, %s25
      %p31 = scmp.ge.s32.totalorder %s30, 1
      %s32 = scalar_select %p31, 0, %s30
      %s33 = sadd.s32 1, %s24
      %s34 = scalar_select %p31, %s33, %s24
      %p35 = scmp.ge.s32.totalorder %s34, 2
      %s36 = scalar_select %p35, 0, %s34
      %s37 = ssub.s32 %s24, %s36
      %s38 = ssub.s32 %s25, %s32
      %s39 = sor.u32 %s37, %s38
      %p40 = scmp.eq.s32.totalorder %s39, 0
      %s42 = sadd.s32 %s41, 1
      %s43 = scalar_select %p40, %s41, %s42
      %p46 = pneg %p40
      %p47 = scmp.eq.s32.totalorder %s17, 1
      %p48 = por %p46, %p47
      %p49 = scmp.ne.s32.totalorder %s41, %s44
      %p50 = scmp.eq.s32.totalorder %s17, 0
      %p51 = por %p49, %p50
      %p52 = scmp.ne.s32.totalorder %s41, %s44
      %p53 = scmp.eq.s32.totalorder %s22, 1
      %p54 = por %p52, %p53
      %p55 = scmp.ne.s32.totalorder %s44, %s45
      %p56 = scmp.eq.s32.totalorder %s22, 0
      %p57 = por %p55, %p56
      %p58 = scmp.ne.s32.totalorder %s44, %s45
      %p59 = scmp.eq.s32.totalorder %s23, 1
      %p60 = por %p58, %p59
      %p62 = scmp.ne.s32.totalorder %s45, %s61
      %p63 = scmp.eq.s32.totalorder %s23, 0
      %p64 = por %p62, %p63
      %s65 = ssub.s32 %s24, %s36
      %p66 = scmp.eq.s32.totalorder %s65, 0
      %s68 = sadd.s32 %s67, 1
      %s69 = scalar_select %p66, %s67, %s68
      %p72 = pneg %p66
      %p73 = scmp.eq.s32.totalorder %s17, 1
      %p74 = por %p72, %p73
      %p75 = scmp.ne.s32.totalorder %s67, %s70
      %p76 = scmp.eq.s32.totalorder %s17, 0
      %p77 = por %p75, %p76
      %p78 = scmp.ne.s32.totalorder %s67, %s70
      %p79 = scmp.eq.s32.totalorder %s22, 1
      %p80 = por %p78, %p79
      %p81 = scmp.ne.s32.totalorder %s70, %s71
      %p82 = scmp.eq.s32.totalorder %s22, 0
      %p83 = por %p81, %p82
      %p84 = scmp.ne.s32.totalorder %s70, %s71
      %p85 = scmp.eq.s32.totalorder %s23, 1
      %p86 = por %p84, %p85
      %p88 = scmp.ne.s32.totalorder %s71, %s87
      %p89 = scmp.eq.s32.totalorder %s23, 0
      %p90 = por %p88, %p89
      %s92 = sadd.s32 %s91, 1
      %p95 = scmp.eq.s32.totalorder %s17, 1
      %p96 = scmp.ne.s32.totalorder %s91, %s93
      %p97 = scmp.eq.s32.totalorder %s17, 0
      %p98 = por %p96, %p97
      %p99 = scmp.ne.s32.totalorder %s91, %s93
      %p100 = scmp.eq.s32.totalorder %s22, 1
      %p101 = por %p99, %p100
      %p102 = scmp.ne.s32.totalorder %s93, %s94
      %p103 = scmp.eq.s32.totalorder %s22, 0
      %p104 = por %p102, %p103
      %p105 = scmp.ne.s32.totalorder %s93, %s94
      %p106 = scmp.eq.s32.totalorder %s23, 1
      %p107 = por %p105, %p106
      %p109 = scmp.ne.s32.totalorder %s94, %s108
      %p110 = scmp.eq.s32.totalorder %s23, 0
      %p111 = por %p109, %p110
      %s113 = sadd.s32 %s112, 1
      %p116 = scmp.eq.s32.totalorder %s17, 1
      %p117 = scmp.ne.s32.totalorder %s112, %s114
      %p118 = scmp.eq.s32.totalorder %s17, 0
      %p119 = por %p117, %p118
      %p120 = scmp.ne.s32.totalorder %s112, %s114
      %p121 = scmp.eq.s32.totalorder %s22, 1
      %p122 = por %p120, %p121
      %p123 = scmp.ne.s32.totalorder %s114, %s115
      %p124 = scmp.eq.s32.totalorder %s22, 0
      %p125 = por %p123, %p124
      %p126 = scmp.ne.s32.totalorder %s114, %s115
      %p127 = scmp.eq.s32.totalorder %s23, 1
      %p128 = por %p126, %p127
      %p130 = scmp.ne.s32.totalorder %s115, %s129
      %p131 = scmp.eq.s32.totalorder %s23, 0
      %p132 = por %p130, %p131
      %s134 = sadd.s32 %s133, 1
      %p137 = scmp.eq.s32.totalorder %s17, 1
      %p138 = scmp.ne.s32.totalorder %s133, %s135
      %p139 = scmp.eq.s32.totalorder %s17, 0
      %p140 = por %p138, %p139
      %p141 = scmp.ne.s32.totalorder %s133, %s135
      %p142 = scmp.eq.s32.totalorder %s22, 1
      %p143 = por %p141, %p142
      %p144 = scmp.ne.s32.totalorder %s135, %s136
      %p145 = scmp.eq.s32.totalorder %s22, 0
      %p146 = por %p144, %p145
      %p147 = scmp.ne.s32.totalorder %s135, %s136
      %p148 = scmp.eq.s32.totalorder %s23, 1
      %p149 = por %p147, %p148
      %p151 = scmp.ne.s32.totalorder %s136, %s150
      %p152 = scmp.eq.s32.totalorder %s23, 0
      %p153 = por %p151, %p152
      %s155 = sadd.s32 %s154, 1
      %p158 = scmp.eq.s32.totalorder %s17, 1
      %p159 = scmp.ne.s32.totalorder %s154, %s156
      %p160 = scmp.eq.s32.totalorder %s17, 0
      %p161 = por %p159, %p160
      %p162 = scmp.ne.s32.totalorder %s154, %s156
      %p163 = scmp.eq.s32.totalorder %s22, 1
      %p164 = por %p162, %p163
      %p165 = scmp.ne.s32.totalorder %s156, %s157
      %p166 = scmp.eq.s32.totalorder %s22, 0
      %p167 = por %p165, %p166
      %p168 = scmp.ne.s32.totalorder %s156, %s157
      %p169 = scmp.eq.s32.totalorder %s23, 1
      %p170 = por %p168, %p169
      %p172 = scmp.ne.s32.totalorder %s157, %s171
      %p173 = scmp.eq.s32.totalorder %s23, 0
      %p174 = por %p172, %p173
      %s176 = sadd.s32 %s175, 1
      %p179 = scmp.eq.s32.totalorder %s17, 1
      %p180 = scmp.ne.s32.totalorder %s175, %s177
      %p181 = scmp.eq.s32.totalorder %s17, 0
      %p182 = por %p180, %p181
      %p183 = scmp.ne.s32.totalorder %s175, %s177
      %p184 = scmp.eq.s32.totalorder %s22, 1
      %p185 = por %p183, %p184
      %p186 = scmp.ne.s32.totalorder %s177, %s178
      %p187 = scmp.eq.s32.totalorder %s22, 0
      %p188 = por %p186, %p187
      %p189 = scmp.ne.s32.totalorder %s177, %s178
      %p190 = scmp.eq.s32.totalorder %s23, 1
      %p191 = por %p189, %p190
      %p193 = scmp.ne.s32.totalorder %s178, %s192
      %p194 = scmp.eq.s32.totalorder %s23, 0
      %p195 = por %p193, %p194
      %s196 = ssub.s32 %s24, %s36
      %s197 = ssub.s32 %s25, %s32
      %s198 = sor.u32 %s196, %s197
      %p199 = scmp.eq.s32.totalorder %s198, 0
      %s201 = sadd.s32 %s200, 1
      %s202 = scalar_select %p199, %s200, %s201
      %p205 = pneg %p199
      %p206 = scmp.eq.s32.totalorder %s17, 1
      %p207 = por %p205, %p206
      %p208 = scmp.ne.s32.totalorder %s200, %s203
      %p209 = scmp.eq.s32.totalorder %s17, 0
      %p210 = por %p208, %p209
      %p211 = scmp.ne.s32.totalorder %s200, %s203
      %p212 = scmp.eq.s32.totalorder %s22, 1
      %p213 = por %p211, %p212
      %p214 = scmp.ne.s32.totalorder %s203, %s204
      %p215 = scmp.eq.s32.totalorder %s22, 0
      %p216 = por %p214, %p215
      %p217 = scmp.ne.s32.totalorder %s203, %s204
      %p218 = scmp.eq.s32.totalorder %s23, 1
      %p219 = por %p217, %p218
      %p221 = scmp.ne.s32.totalorder %s204, %s220
      %p222 = scmp.eq.s32.totalorder %s23, 0
      %p223 = por %p221, %p222
      %p224 = scmp.le.s32.totalorder 1, %s17
      %p225 = scmp.lt.s32.totalorder %s17, 3
      %p226 = pnand %p224, %p225
      %p227 = pneg %p226
      // Predicated region
      $region9: #{tpu_custom_call.1} parent=5 // pred_check
        _
      $region10: #{tpu_custom_call.1} parent=5 // pred_check_branch
        %229 = sbr.rel (%p226) target = $region12
      $region11: #{tpu_custom_call.1} parent=5 // pred_region
        %s230 = ssub.s32 %s17, 1
        // Predicated region
        $region13: #{tpu_custom_call.1} parent=11 // pred_check
          %p231 = pneg %p104
        $region14: #{tpu_custom_call.1} parent=11 // pred_check_branch
          %233 = sbr.rel (%p231) target = $region16
        $region15: #{tpu_custom_call.1} parent=11 // pred_region
          %s235 = ssub.s32 256, 256
          %236 = vsyncadd [#allocation3], %s235
          %s237 = sshll.u32 [#allocation2], 4
          %s238 = int_to_ptr.vmem [resolvable:$true] %s237
          %243 = dma.hbm_to_vmem [thread:$0]  %s2, 256, %s238, [#allocation3], 64, 64, 4
        $region16: #{tpu_custom_call.1} parent=11 // pred_fallthru
          _
        // Predicated region
        $region17: #{tpu_custom_call.1} parent=11 // pred_check
          %p244 = pneg %p125
        $region18: #{tpu_custom_call.1} parent=11 // pred_check_branch
          %246 = sbr.rel (%p244) target = $region20
        $region19: #{tpu_custom_call.1} parent=11 // pred_region
          _
        $region20: #{tpu_custom_call.1} parent=11 // pred_fallthru
          _
        // Predicated region
        $region21: #{tpu_custom_call.1} parent=11 // pred_check
          %p247 = pneg %p146
        $region22: #{tpu_custom_call.1} parent=11 // pred_check_branch
          %249 = sbr.rel (%p247) target = $region24
        $region23: #{tpu_custom_call.1} parent=11 // pred_region
          _
        $region24: #{tpu_custom_call.1} parent=11 // pred_fallthru
          _
        // Predicated region
        $region25: #{tpu_custom_call.1} parent=11 // pred_check
          %p250 = pneg %p167
        $region26: #{tpu_custom_call.1} parent=11 // pred_check_branch
          %252 = sbr.rel (%p250) target = $region28
        $region27: #{tpu_custom_call.1} parent=11 // pred_region
          _
        $region28: #{tpu_custom_call.1} parent=11 // pred_fallthru
          _
        // Predicated region
        $region29: #{tpu_custom_call.1} parent=11 // pred_check
          %p253 = pneg %p188
        $region30: #{tpu_custom_call.1} parent=11 // pred_check_branch
          %255 = sbr.rel (%p253) target = $region32
        $region31: #{tpu_custom_call.1} parent=11 // pred_region
          _
        $region32: #{tpu_custom_call.1} parent=11 // pred_fallthru
          _
      $region12: #{tpu_custom_call.1} parent=5 // pred_fallthru
        _
      %p256 = scmp.lt.s32.totalorder %s17, 2
      // Predicated region
      $region33: #{tpu_custom_call.1} parent=5 // pred_check
        %p257 = pneg %p256
      $region34: #{tpu_custom_call.1} parent=5 // pred_check_branch
        %259 = sbr.rel (%p257) target = $region36
      $region35: #{tpu_custom_call.1} parent=5 // pred_region
        // Predicated region
        $region37: #{tpu_custom_call.1} parent=35 // pred_check
          %p260 = pneg %p51
        $region38: #{tpu_custom_call.1} parent=35 // pred_check_branch
          %262 = sbr.rel (%p260) target = $region40
        $region39: #{tpu_custom_call.1} parent=35 // pred_region
          %s263 = smul.u32 2, %s25
          %p264 = scmp.lt.s32.totalorder %s24, 1
          %s265 = scalar_select %p264, %s24, 1
          %p266 = scmp.lt.s32.totalorder %s263, 1
          %s267 = scalar_select %p266, %s263, 1
          %s268 = smul.addr %s265, 8
          %s269 = sadd.s32 %s267, %s268
          %s270 = smul.addr %s269, 4
          %s271 = scalar_lea.vmem %s0, %s270
          %s272 = smul.u32 2, %s25
        $region40: #{tpu_custom_call.1} parent=35 // pred_fallthru
          _
        // Predicated region
        $region41: #{tpu_custom_call.1} parent=35 // pred_check
          %p273 = pneg %p77
        $region42: #{tpu_custom_call.1} parent=35 // pred_check_branch
          %275 = sbr.rel (%p273) target = $region44
        $region43: #{tpu_custom_call.1} parent=35 // pred_region
          %p276 = scmp.lt.s32.totalorder %s24, 1
          %s277 = scalar_select %p276, %s24, 1
          %s278 = smul.addr %s277, 4
          %s279 = smul.addr %s278, 8
          %s280 = scalar_lea.vmem %s1, %s279
        $region44: #{tpu_custom_call.1} parent=35 // pred_fallthru
          _
      $region36: #{tpu_custom_call.1} parent=5 // pred_fallthru
        _
      %p281 = scmp.le.s32.totalorder 1, %s17
      %p282 = scmp.lt.s32.totalorder %s17, 3
      %p283 = pnand %p281, %p282
      %p284 = pneg %p283
      // Predicated region
      $region45: #{tpu_custom_call.1} parent=5 // pred_check
        _
      $region46: #{tpu_custom_call.1} parent=5 // pred_check_branch
        %286 = sbr.rel (%p283) target = $region48
      $region47: #{tpu_custom_call.1} parent=5 // pred_region
        %s287 = ssub.s32 %s17, 1
        // Predicated region
        $region49: #{tpu_custom_call.1} parent=47 // pred_check
          %p288 = pneg %p104
        $region50: #{tpu_custom_call.1} parent=47 // pred_check_branch
          %290 = sbr.rel (%p288) target = $region52
        $region51: #{tpu_custom_call.1} parent=47 // pred_region
          %291 = dma.done [#allocation3], 256
        $region52: #{tpu_custom_call.1} parent=47 // pred_fallthru
          _
        %s292 = smul.u32 2, %s27
        %p293 = scmp.lt.s32.totalorder %s26, 1
        %s294 = scalar_select %p293, %s26, 1
        %p295 = scmp.lt.s32.totalorder %s292, 1
        %s296 = scalar_select %p295, %s292, 1
        %s297 = smul.addr %s294, 8
        %s298 = sadd.s32 %s296, %s297
        %s299 = smul.addr %s298, 4
        %s300 = scalar_lea.vmem %s0, %s299
        %p301 = pneg %p57
        %p302 = pneg %p54
        %p303 = scmp.lt.s32.totalorder %s26, 1
        %s304 = scalar_select %p303, %s26, 1
        %s305 = smul.addr %s304, 4
        %s306 = smul.addr %s305, 8
        %s307 = scalar_lea.vmem %s1, %s306
        %p308 = pneg %p83
        %p309 = pneg %p80
        %p310 = pneg %p104
        %p311 = pneg %p101
        %p312 = pneg %p125
        %p313 = pneg %p122
        %p314 = pneg %p146
        %p315 = pneg %p143
        %p316 = pneg %p167
        %p317 = pneg %p164
        %p318 = pneg %p188
        %p319 = pneg %p185
        %p320 = pneg %p216
        %p321 = pneg %p213
        %s322 = sand.u32 %s203, 1
        %s323 = scalar_lea.sflag [#allocation4], %s322
        %s324 = sand.u32 %s203, 1
        %s325 = smul.addr %s324, 4
        %s326 = scalar_lea.vmem [#allocation5], %s325
        %s327 = smul.u32 2, %s27
        %p328 = scmp.lt.s32.totalorder %s26, 1
        %s329 = scalar_select %p328, %s26, 1
        %p330 = scmp.lt.s32.totalorder %s327, 1
        %s331 = scalar_select %p330, %s327, 1
        %s332 = smul.addr %s329, 8
        %s333 = sadd.s32 %s331, %s332
        %s334 = smul.addr %s333, 4
        %s335 = scalar_lea.vmem %s0, %s334
        %s336 = smul.u32 2, %s27
        %p337 = scmp.lt.s32.totalorder %s26, 1
        %s338 = scalar_select %p337, %s26, 1
        %s339 = smul.addr %s338, 4
        %s340 = smul.addr %s339, 8
        %s341 = scalar_lea.vmem %s1, %s340
        %s342 = smul.u32 2, %s27
        %v344 = vld [vmem:[%s335] sm:$0xff]
        %v345 = vld [vmem:[%s335 + $0x8] sm:$0xff]
        %v346 = vld [vmem:[%s335 + $0x10] sm:$0xff]
        %v347 = vld [vmem:[%s335 + $0x18] sm:$0xff]
        %v348 = vld [vmem:[#allocation2] sm:$0xf]
        %v349 = vld [vmem:[#allocation2 + $0x4] sm:$0xf]
        %v350 = vld [vmem:[#allocation2 + $0x8] sm:$0xf]
        %v351 = vld [vmem:[#allocation2 + $0xc] sm:$0xf]
        %v352 = vld [vmem:[%s341] sm:$0xff]
        %v353 = vld [vmem:[%s341 + $0x8] sm:$0xff]
        %v354 = vld [vmem:[%s341 + $0x10] sm:$0xff]
        %v355 = vld [vmem:[%s341 + $0x18] sm:$0xff]
        %357 = vset.pattern.permute.xlu0 0
        %358 = vperm.xlu0 %357, %v352
        %v359 = vpop.permute.xlu0 %358
        %362 = vset.pattern.permute.xlu0 0
        %363 = vperm.xlu0 %362, %v353
        %v364 = vpop.permute.xlu0 %363
        %367 = vset.pattern.permute.xlu0 0
        %368 = vperm.xlu0 %367, %v354
        %v369 = vpop.permute.xlu0 %368
        %372 = vset.pattern.permute.xlu0 0
        %373 = vperm.xlu0 %372, %v355
        %v374 = vpop.permute.xlu0 %373
        %v380 = vunpack.c.l.b16 %v348
        %v381 = vunpack.c.l.b16 %v349
        %v382 = vunpack.c.l.b16 %v350
        %v383 = vunpack.c.l.b16 %v351
        %v384 = vpack.c.b16 %v381, %v380
        %v385 = vpack.c.b16 %v383, %v382
        %v390 = vunpack.c.l.b16 %v344
        %v391 = vunpack.c.h.b16 %v344
        %v392 = vunpack.c.l.b16 %v345
        %v393 = vunpack.c.h.b16 %v345
        %v394 = vunpack.c.l.b16 %v346
        %v395 = vunpack.c.h.b16 %v346
        %v396 = vunpack.c.l.b16 %v347
        %v397 = vunpack.c.h.b16 %v347
        %v398 = vpack.c.b16 %v392, %v390
        %v399 = vpack.c.b16 %v393, %v391
        %v400 = vpack.c.b16 %v396, %v394
        %v401 = vpack.c.b16 %v397, %v395
        %vm406 = vcmask 261120
        %v408 = vsel %vm406, %v384, 0
        %v411 = vsel %vm406, %v385, 0
        %413 = vmatprep.subr.bf16.mxu0 %v399
        %414 = vmatpush1.bf16.msra.mxu0 %v398
        %415 = vmatprep.subr.bf16.mxu0 %v401
        %416 = vmatpush1.bf16.msra.mxu0 %v400
        %417 = vmatprep.subr.bf16.mxu0 0
        %418 = vmatpush1.bf16.msra.mxu0 0
        %419 = vmatprep.subr.bf16.mxu0 0
        %420 = vmatpush1.bf16.msra.mxu0 0
        %421 = vmatprep.subr.bf16.mxu0 0
        %422 = vmatpush1.bf16.msra.mxu0 0
        %423 = vmatprep.subr.bf16.mxu0 0
        %424 = vmatpush1.bf16.msra.mxu0 0
        %425 = vmatprep.subr.bf16.mxu0 0
        %426 = vmatpush1.bf16.msra.mxu0 0
        %427 = vmatprep.subr.bf16.mxu0 0
        %428 = vmatpush1.bf16.msra.mxu0 0
        %429 = vmatprep.subr.bf16.mxu0 0
        %430 = vmatpush1.bf16.msra.mxu0 0
        %431 = vmatprep.subr.bf16.mxu0 0
        %432 = vmatpush1.bf16.msra.mxu0 0
        %433 = vmatprep.subr.bf16.mxu0 0
        %434 = vmatpush1.bf16.msra.mxu0 0
        %435 = vmatprep.subr.bf16.mxu0 0
        %436 = vmatpush1.bf16.msra.mxu0 0
        %437 = vmatprep.subr.bf16.mxu0 0
        %438 = vmatpush1.bf16.msra.mxu0 0
        %439 = vmatprep.subr.bf16.mxu0 0
        %440 = vmatpush1.bf16.msra.mxu0 0
        %441 = vmatprep.subr.bf16.mxu0 0
        %442 = vmatpush1.bf16.msra.mxu0 0
        %443 = vmatprep.subr.bf16.mxu0 0
        %444 = vmatpush1.bf16.msra.mxu0 0
        %445 = vmatprep.mubr.bf16.mxu0 0
        %446 = vmatmul.mubr.bf16.gmra.mrb[0].mxu0 %v408
        %v447 = vpop.f32.mrb[0].mxu0
        %v448 = vadd.f32 %v359, %v447
        %v449 = vpop.f32.mrb[0].mxu0
        %v450 = vadd.f32 %v359, %v449
        %v451 = vpop.f32.mrb[0].mxu0
        %v452 = vadd.f32 %v364, %v451
        %v453 = vpop.f32.mrb[0].mxu0
        %v454 = vadd.f32 %v364, %v453
        %455 = vmatprep.mubr.bf16.mxu0 0
        %456 = vmatmul.mubr.bf16.gmra.mrb[0].mxu0 %v411
        %v457 = vpop.f32.mrb[0].mxu0
        %v458 = vadd.f32 %v369, %v457
        %v459 = vpop.f32.mrb[0].mxu0
        %v460 = vadd.f32 %v369, %v459
        %v461 = vpop.f32.mrb[0].mxu0
        %v462 = vadd.f32 %v374, %v461
        %v463 = vpop.f32.mrb[0].mxu0
        %v464 = vadd.f32 %v374, %v463
        %465 = vdwg.mxu0
        %v466 = vmax.f32 %v448, 0.0
        %v467 = vmax.f32 %v450, 0.0
        %v468 = vmax.f32 %v452, 0.0
        %v469 = vmax.f32 %v454, 0.0
        %v470 = vmax.f32 %v458, 0.0
        %v471 = vmax.f32 %v460, 0.0
        %v472 = vmax.f32 %v462, 0.0
        %v473 = vmax.f32 %v464, 0.0
        %v474 = vld [vmem:[%s3] sm:$0xff]
        %v475 = vld [vmem:[%s3 + $0x8] sm:$0xff]
        %v476 = vld [vmem:[%s3 + $0x10] sm:$0xff]
        %v477 = vld [vmem:[%s3 + $0x18] sm:$0xff]
        %v478 = vld [vmem:[%s4] sm:$0xff]
        %v479 = vld [vmem:[%s4 + $0x8] sm:$0xff]
        %v480 = vld [vmem:[%s4 + $0x10] sm:$0xff]
        %v481 = vld [vmem:[%s4 + $0x18] sm:$0xff]
        %483 = vset.pattern.permute.xlu0 0
        %484 = vperm.xlu0 %483, %v478
        %v485 = vpop.permute.xlu0 %484
        %488 = vset.pattern.permute.xlu0 0
        %489 = vperm.xlu0 %488, %v479
        %v490 = vpop.permute.xlu0 %489
        %493 = vset.pattern.permute.xlu0 0
        %494 = vperm.xlu0 %493, %v480
        %v495 = vpop.permute.xlu0 %494
        %498 = vset.pattern.permute.xlu0 0
        %499 = vperm.xlu0 %498, %v481
        %v500 = vpop.permute.xlu0 %499
        %v503 = vsel %vm406, %v474, 0
        %v506 = vsel %vm406, %v475, 0
        %v509 = vsel %vm406, %v476, 0
        %v512 = vsel %vm406, %v477, 0
        %514 = vmatprep.subr.mxu0 %v467
        %515 = vmatpush1.msra.mxu0 %v466
        %516 = vmatprep.subr.mxu0 %v469
        %517 = vmatpush1.msra.mxu0 %v468
        %518 = vmatprep.subr.mxu0 %v471
        %519 = vmatpush1.msra.mxu0 %v470
        %520 = vmatprep.subr.mxu0 %v473
        %521 = vmatpush1.msra.mxu0 %v472
        %522 = vmatprep.subr.mxu0 0.0
        %523 = vmatpush1.msra.mxu0 0.0
        %524 = vmatprep.subr.mxu0 0.0
        %525 = vmatpush1.msra.mxu0 0.0
        %526 = vmatprep.subr.mxu0 0.0
        %527 = vmatpush1.msra.mxu0 0.0
        %528 = vmatprep.subr.mxu0 0.0
        %529 = vmatpush1.msra.mxu0 0.0
        %530 = vmatprep.subr.mxu0 0.0
        %531 = vmatpush1.msra.mxu0 0.0
        %532 = vmatprep.subr.mxu0 0.0
        %533 = vmatpush1.msra.mxu0 0.0
        %534 = vmatprep.subr.mxu0 0.0
        %535 = vmatpush1.msra.mxu0 0.0
        %536 = vmatprep.subr.mxu0 0.0
        %537 = vmatpush1.msra.mxu0 0.0
        %538 = vmatprep.subr.mxu0 0.0
        %539 = vmatpush1.msra.mxu0 0.0
        %540 = vmatprep.subr.mxu0 0.0
        %541 = vmatpush1.msra.mxu0 0.0
        %542 = vmatprep.subr.mxu0 0.0
        %543 = vmatpush1.msra.mxu0 0.0
        %544 = vmatprep.subr.mxu0 0.0
        %545 = vmatpush1.msra.mxu0 0.0
        %546 = vmatprep.subr.mxu0 0.0
        %547 = vmatpush1.msra.mxu0 0.0
        %548 = vmatprep.subr.mxu0 0.0
        %549 = vmatpush1.msra.mxu0 0.0
        %550 = vmatprep.subr.mxu0 0.0
        %551 = vmatpush1.msra.mxu0 0.0
        %552 = vmatprep.subr.mxu0 0.0
        %553 = vmatpush1.msra.mxu0 0.0
        %554 = vmatprep.subr.mxu0 0.0
        %555 = vmatpush1.msra.mxu0 0.0
        %556 = vmatprep.subr.mxu0 0.0
        %557 = vmatpush1.msra.mxu0 0.0
        %558 = vmatprep.subr.mxu0 0.0
        %559 = vmatpush1.msra.mxu0 0.0
        %560 = vmatprep.subr.mxu0 0.0
        %561 = vmatpush1.msra.mxu0 0.0
        %562 = vmatprep.subr.mxu0 0.0
        %563 = vmatpush1.msra.mxu0 0.0
        %564 = vmatprep.subr.mxu0 0.0
        %565 = vmatpush1.msra.mxu0 0.0
        %566 = vmatprep.subr.mxu0 0.0
        %567 = vmatpush1.msra.mxu0 0.0
        %568 = vmatprep.subr.mxu0 0.0
        %569 = vmatpush1.msra.mxu0 0.0
        %570 = vmatprep.subr.mxu0 0.0
        %571 = vmatpush1.msra.mxu0 0.0
        %572 = vmatprep.subr.mxu0 0.0
        %573 = vmatpush1.msra.mxu0 0.0
        %574 = vmatprep.subr.mxu0 0.0
        %575 = vmatpush1.msra.mxu0 0.0
        %576 = vmatprep.subr.mxu0 0.0
        %577 = vmatpush1.msra.mxu0 0.0
        %578 = vmatprep.mubr.f32.mxu0 0.0
        %579 = vmatmul.mubr.f32.gmra.mrb[0].mxu0 %v503
        %v580 = vpop.f32.mrb[0].mxu0
        %v581 = vadd.f32 %v485, %v580
        %v582 = vpop.f32.mrb[0].mxu0
        %v583 = vadd.f32 %v485, %v582
        %584 = vmatprep.mubr.f32.mxu0 0.0
        %585 = vmatmul.mubr.f32.gmra.mrb[0].mxu0 %v506
        %v586 = vpop.f32.mrb[0].mxu0
        %v587 = vadd.f32 %v490, %v586
        %v588 = vpop.f32.mrb[0].mxu0
        %v589 = vadd.f32 %v490, %v588
        %590 = vmatprep.mubr.f32.mxu0 0.0
        %591 = vmatmul.mubr.f32.gmra.mrb[0].mxu0 %v509
        %v592 = vpop.f32.mrb[0].mxu0
        %v593 = vadd.f32 %v495, %v592
        %v594 = vpop.f32.mrb[0].mxu0
        %v595 = vadd.f32 %v495, %v594
        %596 = vmatprep.mubr.f32.mxu0 0.0
        %597 = vmatmul.mubr.f32.gmra.mrb[0].mxu0 %v512
        %v598 = vpop.f32.mrb[0].mxu0
        %v599 = vadd.f32 %v500, %v598
        %v600 = vpop.f32.mrb[0].mxu0
        %v601 = vadd.f32 %v500, %v600
        %602 = vdwg.mxu0
        %v603 = vmax.f32 %v581, 0.0
        %v604 = vmax.f32 %v583, 0.0
        %v605 = vmax.f32 %v587, 0.0
        %v606 = vmax.f32 %v589, 0.0
        %v607 = vmax.f32 %v593, 0.0
        %v608 = vmax.f32 %v595, 0.0
        %v609 = vmax.f32 %v599, 0.0
        %v610 = vmax.f32 %v601, 0.0
        %v611 = vld [vmem:[%s5] sm:$0xf]
        %v612 = vld [vmem:[%s6] sm:$0xf]
        %614 = vset.pattern.permute.xlu0 0
        %615 = vperm.xlu0 %614, %v612
        %v616 = vpop.permute.xlu0 %615
        %v619 = vsel %vm406, %v611, 0
        %621 = vmatprep.subr.mxu0 %v604
        %622 = vmatpush1.msra.mxu0 %v603
        %623 = vmatprep.subr.mxu0 %v606
        %624 = vmatpush1.msra.mxu0 %v605
        %625 = vmatprep.subr.mxu0 %v608
        %626 = vmatpush1.msra.mxu0 %v607
        %627 = vmatprep.subr.mxu0 %v610
        %628 = vmatpush1.msra.mxu0 %v609
        %629 = vmatprep.subr.mxu0 0.0
        %630 = vmatpush1.msra.mxu0 0.0
        %631 = vmatprep.subr.mxu0 0.0
        %632 = vmatpush1.msra.mxu0 0.0
        %633 = vmatprep.subr.mxu0 0.0
        %634 = vmatpush1.msra.mxu0 0.0
        %635 = vmatprep.subr.mxu0 0.0
        %636 = vmatpush1.msra.mxu0 0.0
        %637 = vmatprep.subr.mxu0 0.0
        %638 = vmatpush1.msra.mxu0 0.0
        %639 = vmatprep.subr.mxu0 0.0
        %640 = vmatpush1.msra.mxu0 0.0
        %641 = vmatprep.subr.mxu0 0.0
        %642 = vmatpush1.msra.mxu0 0.0
        %643 = vmatprep.subr.mxu0 0.0
        %644 = vmatpush1.msra.mxu0 0.0
        %645 = vmatprep.subr.mxu0 0.0
        %646 = vmatpush1.msra.mxu0 0.0
        %647 = vmatprep.subr.mxu0 0.0
        %648 = vmatpush1.msra.mxu0 0.0
        %649 = vmatprep.subr.mxu0 0.0
        %650 = vmatpush1.msra.mxu0 0.0
        %651 = vmatprep.subr.mxu0 0.0
        %652 = vmatpush1.msra.mxu0 0.0
        %653 = vmatprep.subr.mxu0 0.0
        %654 = vmatpush1.msra.mxu0 0.0
        %655 = vmatprep.subr.mxu0 0.0
        %656 = vmatpush1.msra.mxu0 0.0
        %657 = vmatprep.subr.mxu0 0.0
        %658 = vmatpush1.msra.mxu0 0.0
        %659 = vmatprep.subr.mxu0 0.0
        %660 = vmatpush1.msra.mxu0 0.0
        %661 = vmatprep.subr.mxu0 0.0
        %662 = vmatpush1.msra.mxu0 0.0
        %663 = vmatprep.subr.mxu0 0.0
        %664 = vmatpush1.msra.mxu0 0.0
        %665 = vmatprep.subr.mxu0 0.0
        %666 = vmatpush1.msra.mxu0 0.0
        %667 = vmatprep.subr.mxu0 0.0
        %668 = vmatpush1.msra.mxu0 0.0
        %669 = vmatprep.subr.mxu0 0.0
        %670 = vmatpush1.msra.mxu0 0.0
        %671 = vmatprep.subr.mxu0 0.0
        %672 = vmatpush1.msra.mxu0 0.0
        %673 = vmatprep.subr.mxu0 0.0
        %674 = vmatpush1.msra.mxu0 0.0
        %675 = vmatprep.subr.mxu0 0.0
        %676 = vmatpush1.msra.mxu0 0.0
        %677 = vmatprep.subr.mxu0 0.0
        %678 = vmatpush1.msra.mxu0 0.0
        %679 = vmatprep.subr.mxu0 0.0
        %680 = vmatpush1.msra.mxu0 0.0
        %681 = vmatprep.subr.mxu0 0.0
        %682 = vmatpush1.msra.mxu0 0.0
        %683 = vmatprep.subr.mxu0 0.0
        %684 = vmatpush1.msra.mxu0 0.0
        %685 = vmatprep.mubr.f32.mxu0 0.0
        %686 = vmatmul.mubr.f32.gmra.mrb[0].mxu0 %v619
        %v687 = vpop.f32.mrb[0].mxu0
        %v688 = vadd.f32 %v616, %v687
        %v689 = vpop.f32.mrb[0].mxu0
        %v690 = vadd.f32 %v616, %v689
        %691 = vdwg.mxu0
        %v692 = vpack.c.bf16 %v688, %v688
        %v693 = vpack.c.bf16 %v690, %v690
        %v696 = vcombine.low %v692, %v693
        %v698 = vunpack.c.l.s4 1983009808
        %v699 = vunpack.c.0.s8 %v698
        %v700 = vlaneseq
        %v701 = vshrl.u32 %v700, 7
        %v702 = vsub.s32 %v699, %v701
        %v703 = vrot.slane %v696, %v702
        %705 = vst [vmem:[%s326] sm:$0xf] %v703
        %s706 = sand.u32 %s203, 1
        %s707 = scalar_lea.sflag [#allocation4], %s706
        %s708 = sand.u32 %s203, 1
        %s709 = smul.addr %s708, 4
        %s710 = scalar_lea.vmem [#allocation5], %s709
        // Predicated region
        $region53: #{tpu_custom_call.1} parent=47 // pred_check
          %p711 = pneg %p213
        $region54: #{tpu_custom_call.1} parent=47 // pred_check_branch
          %713 = sbr.rel (%p711) target = $region56
        $region55: #{tpu_custom_call.1} parent=47 // pred_region
          %s714 = smul.u32 2, %s27
          %s716 = ssub.s32 64, 64
          %717 = vsyncadd %s707, %s716
          %s718 = smul.addr %s26, 2
          %s719 = sadd.s32 %s714, %s718
          %s720 = smul.addr %s719, 32
          %s721 = scalar_lea.hbm %s7, %s720
          %s723 = sshll.u32 %s710, 4
          %s724 = int_to_ptr.vmem [resolvable:$true] %s723
          %726 = dma.vmem_to_hbm [thread:$0]  %s724, 64, %s721, %s707
        $region56: #{tpu_custom_call.1} parent=47 // pred_fallthru
          _
      $region48: #{tpu_custom_call.1} parent=5 // pred_fallthru
        _
      %p727 = scmp.le.s32.totalorder 2, %s17
      // Predicated region
      $region57: #{tpu_custom_call.1} parent=5 // pred_check
        %p728 = pneg %p727
      $region58: #{tpu_custom_call.1} parent=5 // pred_check_branch
        %730 = sbr.rel (%p728) target = $region60
      $region59: #{tpu_custom_call.1} parent=5 // pred_region
        %s731 = ssub.s32 %s17, 2
        // Predicated region
        $region61: #{tpu_custom_call.1} parent=59 // pred_check
          %p732 = pneg %p219
        $region62: #{tpu_custom_call.1} parent=59 // pred_check_branch
          %734 = sbr.rel (%p732) target = $region64
        $region63: #{tpu_custom_call.1} parent=59 // pred_region
          %s735 = sand.u32 %s204, 1
          %s736 = scalar_lea.sflag [#allocation4], %s735
          %s737 = sand.u32 %s204, 1
          %s738 = smul.addr %s737, 4
          %s739 = scalar_lea.vmem [#allocation5], %s738
          %740 = dma.done %s736, 64
        $region64: #{tpu_custom_call.1} parent=59 // pred_fallthru
          _
      $region60: #{tpu_custom_call.1} parent=5 // pred_fallthru
        _
    $region6: #{tpu_custom_call.1} parent=1 // loop_footer
      %s21 = sadd.s32 1, %s17
    $region7: #{tpu_custom_call.1} parent=1 // loop_footer_branch
      %16 = sbr.rel target = $region3
    $region8: #{tpu_custom_call.1} parent=1 // loop_exit
      _
    %741 = vsyncpa [#allocation3], 1
    %s742 = scalar_lea.sflag [#allocation3], 1
    %743 = vsyncpa %s742, 1
    %744 = vsyncpa [#allocation4], 1
    %s745 = scalar_lea.sflag [#allocation4], 1
    %746 = vsyncpa %s745, 1

// kernel: tpu_custom_call.1
$region0: #{tpu_custom_call.1}
  #allocation0 [shape = 'u32[]', space=smem, size = 0x4, offset = 0x4, fixed_abs, tag = 'smem constant byte address 0x4 - core index']
  #allocation1 [shape = 'u32[144,128]{1,0:T(1,128)}', space=vmem, size = 0x12000, scoped, tag = 'internal scratch']
  %s0 = inlined_call_operand.vmem [shape: bf16[2,32,256], index: 0, kind: input, shape index: {}]
  %s1 = inlined_call_operand.vmem [shape: f32[2,32,1], index: 1, kind: input, shape index: {}]
  %s2 = inlined_call_operand.hbm [shape: bf16[32,32], index: 2, kind: input, shape index: {}]
  %s3 = inlined_call_operand.vmem [shape: f32[32,32], index: 3, kind: input, shape index: {}]
  %s4 = inlined_call_operand.vmem [shape: f32[32,1], index: 4, kind: input, shape index: {}]
  %s5 = inlined_call_operand.vmem [shape: f32[4,32], index: 5, kind: input, shape index: {}]
  %s6 = inlined_call_operand.vmem [shape: f32[4,1], index: 6, kind: input, shape index: {}]
  %s7 = inlined_call_operand.hbm [shape: bf16[2,4,256], index: 7, kind: output, shape index: {}]
  %s8 = sld [smem:[#allocation0]]
  $region65: #{tpu_custom_call.1} parent=0
    _
  %s10 = ssub.s32 1, %s8
  %s11 = scalar_select 0, %s10, %s8
  $region1: #{tpu_custom_call.1} parent=0
    #allocation2 [shape = 'u8[8192]{0}', space=vmem, size = 0x2000, scoped, tag = 'input window, operand 2, single buffered']
    #allocation3 [shape = 's32[2]{0}', space=sflag, size = 0x8, scoped, tag = 'scoped memory for tpu_custom_call.1']
    #allocation4 [shape = 's32[2]{0}', space=sflag, size = 0x8, scoped, tag = 'scoped memory for tpu_custom_call.1']
    #allocation5 [shape = 'u8[4096]{0}', space=vmem, size = 0x1000, scoped, tag = 'output window, operand 0']
    %12 = vsyncpa [#allocation3], 0
    %13 = vsyncpa [#allocation4], 0
    %s14 = scalar_lea.sflag [#allocation4], 1
    %15 = vsyncpa %s14, 0
    loop: start=0, step=1, limit=4
    $region2: #{tpu_custom_call.1} parent=1 // loop_pre_header
      _
    $region3: #{tpu_custom_call.1} parent=1 // loop_header
      %s17 = sphi 0, %s21
      %p18 = scmp.ge.s32.totalorder %s17, 4
      %s24 = sphi 0, %s36
      %s25 = sphi 0, %s32
      %s26 = sphi 0, %s24
      %s27 = sphi 0, %s25
      %s28 = sphi 0, %s26
      %s29 = sphi 0, %s27
      %s41 = sphi 0, %s43
      %s44 = sphi 0, %s41
      %s45 = sphi 0, %s44
      %s61 = sphi 0, %s45
      %s67 = sphi 0, %s69
      %s70 = sphi 0, %s67
      %s71 = sphi 0, %s70
      %s87 = sphi 0, %s71
      %s91 = sphi 0, %s91
      %s93 = sphi 0, %s91
      %s94 = sphi 0, %s93
      %s108 = sphi 0, %s94
      %s112 = sphi 0, %s112
      %s114 = sphi 0, %s112
      %s115 = sphi 0, %s114
      %s129 = sphi 0, %s115
      %s133 = sphi 0, %s133
      %s135 = sphi 0, %s133
      %s136 = sphi 0, %s135
      %s150 = sphi 0, %s136
      %s154 = sphi 0, %s154
      %s156 = sphi 0, %s154
      %s157 = sphi 0, %s156
      %s171 = sphi 0, %s157
      %s175 = sphi 0, %s175
      %s177 = sphi 0, %s175
      %s178 = sphi 0, %s177
      %s192 = sphi 0, %s178
      %s200 = sphi 0, %s202
      %s203 = sphi 0, %s200
      %s204 = sphi 0, %s203
      %s220 = sphi 0, %s204
    $region4: #{tpu_custom_call.1} parent=1 // loop_header_branch
      %20 = sbr.rel (%p18) target = $region8
    $region5: #{tpu_custom_call.1} parent=1 // loop_body
      %s22 = ssub.s32 %s17, 1
      %s23 = ssub.s32 %s17, 2
      %s30 = sadd.s32 1, %s25
      %p31 = scmp.ge.s32.totalorder %s30, 1
      %s32 = scalar_select %p31, 0, %s30
      %s33 = sadd.s32 1, %s24
      %s34 = scalar_select %p31, %s33, %s24
      %p35 = scmp.ge.s32.totalorder %s34, 2
      %s36 = scalar_select %p35, 0, %s34
      %s37 = ssub.s32 %s24, %s36
      %s38 = ssub.s32 %s25, %s32
      %s39 = sor.u32 %s37, %s38
      %p40 = scmp.eq.s32.totalorder %s39, 0
      %s42 = sadd.s32 %s41, 1
      %s43 = scalar_select %p40, %s41, %s42
      %p46 = pneg %p40
      %p47 = scmp.eq.s32.totalorder %s17, 1
      %p48 = por %p46, %p47
      %p49 = scmp.ne.s32.totalorder %s41, %s44
      %p50 = scmp.eq.s32.totalorder %s17, 0
      %p51 = por %p49, %p50
      %p52 = scmp.ne.s32.totalorder %s41, %s44
      %p53 = scmp.eq.s32.totalorder %s22, 1
      %p54 = por %p52, %p53
      %p55 = scmp.ne.s32.totalorder %s44, %s45
      %p56 = scmp.eq.s32.totalorder %s22, 0
      %p57 = por %p55, %p56
      %p58 = scmp.ne.s32.totalorder %s44, %s45
      %p59 = scmp.eq.s32.totalorder %s23, 1
      %p60 = por %p58, %p59
      %p62 = scmp.ne.s32.totalorder %s45, %s61
      %p63 = scmp.eq.s32.totalorder %s23, 0
      %p64 = por %p62, %p63
      %s65 = ssub.s32 %s24, %s36
      %p66 = scmp.eq.s32.totalorder %s65, 0
      %s68 = sadd.s32 %s67, 1
      %s69 = scalar_select %p66, %s67, %s68
      %p72 = pneg %p66
      %p73 = scmp.eq.s32.totalorder %s17, 1
      %p74 = por %p72, %p73
      %p75 = scmp.ne.s32.totalorder %s67, %s70
      %p76 = scmp.eq.s32.totalorder %s17, 0
      %p77 = por %p75, %p76
      %p78 = scmp.ne.s32.totalorder %s67, %s70
      %p79 = scmp.eq.s32.totalorder %s22, 1
      %p80 = por %p78, %p79
      %p81 = scmp.ne.s32.totalorder %s70, %s71
      %p82 = scmp.eq.s32.totalorder %s22, 0
      %p83 = por %p81, %p82
      %p84 = scmp.ne.s32.totalorder %s70, %s71
      %p85 = scmp.eq.s32.totalorder %s23, 1
      %p86 = por %p84, %p85
      %p88 = scmp.ne.s32.totalorder %s71, %s87
      %p89 = scmp.eq.s32.totalorder %s23, 0
      %p90 = por %p88, %p89
      %s92 = sadd.s32 %s91, 1
      %p95 = scmp.eq.s32.totalorder %s17, 1
      %p96 = scmp.ne.s32.totalorder %s91, %s93
      %p97 = scmp.eq.s32.totalorder %s17, 0
      %p98 = por %p96, %p97
      %p99 = scmp.ne.s32.totalorder %s91, %s93
      %p100 = scmp.eq.s32.totalorder %s22, 1
      %p101 = por %p99, %p100
      %p102 = scmp.ne.s32.totalorder %s93, %s94
      %p103 = scmp.eq.s32.totalorder %s22, 0
      %p104 = por %p102, %p103
      %p105 = scmp.ne.s32.totalorder %s93, %s94
      %p106 = scmp.eq.s32.totalorder %s23, 1
      %p107 = por %p105, %p106
      %p109 = scmp.ne.s32.totalorder %s94, %s108
      %p110 = scmp.eq.s32.totalorder %s23, 0
      %p111 = por %p109, %p110
      %s113 = sadd.s32 %s112, 1
      %p116 = scmp.eq.s32.totalorder %s17, 1
      %p117 = scmp.ne.s32.totalorder %s112, %s114
      %p118 = scmp.eq.s32.totalorder %s17, 0
      %p119 = por %p117, %p118
      %p120 = scmp.ne.s32.totalorder %s112, %s114
      %p121 = scmp.eq.s32.totalorder %s22, 1
      %p122 = por %p120, %p121
      %p123 = scmp.ne.s32.totalorder %s114, %s115
      %p124 = scmp.eq.s32.totalorder %s22, 0
      %p125 = por %p123, %p124
      %p126 = scmp.ne.s32.totalorder %s114, %s115
      %p127 = scmp.eq.s32.totalorder %s23, 1
      %p128 = por %p126, %p127
      %p130 = scmp.ne.s32.totalorder %s115, %s129
      %p131 = scmp.eq.s32.totalorder %s23, 0
      %p132 = por %p130, %p131
      %s134 = sadd.s32 %s133, 1
      %p137 = scmp.eq.s32.totalorder %s17, 1
      %p138 = scmp.ne.s32.totalorder %s133, %s135
      %p139 = scmp.eq.s32.totalorder %s17, 0
      %p140 = por %p138, %p139
      %p141 = scmp.ne.s32.totalorder %s133, %s135
      %p142 = scmp.eq.s32.totalorder %s22, 1
      %p143 = por %p141, %p142
      %p144 = scmp.ne.s32.totalorder %s135, %s136
      %p145 = scmp.eq.s32.totalorder %s22, 0
      %p146 = por %p144, %p145
      %p147 = scmp.ne.s32.totalorder %s135, %s136
      %p148 = scmp.eq.s32.totalorder %s23, 1
      %p149 = por %p147, %p148
      %p151 = scmp.ne.s32.totalorder %s136, %s150
      %p152 = scmp.eq.s32.totalorder %s23, 0
      %p153 = por %p151, %p152
      %s155 = sadd.s32 %s154, 1
      %p158 = scmp.eq.s32.totalorder %s17, 1
      %p159 = scmp.ne.s32.totalorder %s154, %s156
      %p160 = scmp.eq.s32.totalorder %s17, 0
      %p161 = por %p159, %p160
      %p162 = scmp.ne.s32.totalorder %s154, %s156
      %p163 = scmp.eq.s32.totalorder %s22, 1
      %p164 = por %p162, %p163
      %p165 = scmp.ne.s32.totalorder %s156, %s157
      %p166 = scmp.eq.s32.totalorder %s22, 0
      %p167 = por %p165, %p166
      %p168 = scmp.ne.s32.totalorder %s156, %s157
      %p169 = scmp.eq.s32.totalorder %s23, 1
      %p170 = por %p168, %p169
      %p172 = scmp.ne.s32.totalorder %s157, %s171
      %p173 = scmp.eq.s32.totalorder %s23, 0
      %p174 = por %p172, %p173
      %s176 = sadd.s32 %s175, 1
      %p179 = scmp.eq.s32.totalorder %s17, 1
      %p180 = scmp.ne.s32.totalorder %s175, %s177
      %p181 = scmp.eq.s32.totalorder %s17, 0
      %p182 = por %p180, %p181
      %p183 = scmp.ne.s32.totalorder %s175, %s177
      %p184 = scmp.eq.s32.totalorder %s22, 1
      %p185 = por %p183, %p184
      %p186 = scmp.ne.s32.totalorder %s177, %s178
      %p187 = scmp.eq.s32.totalorder %s22, 0
      %p188 = por %p186, %p187
      %p189 = scmp.ne.s32.totalorder %s177, %s178
      %p190 = scmp.eq.s32.totalorder %s23, 1
      %p191 = por %p189, %p190
      %p193 = scmp.ne.s32.totalorder %s178, %s192
      %p194 = scmp.eq.s32.totalorder %s23, 0
      %p195 = por %p193, %p194
      %s196 = ssub.s32 %s24, %s36
      %s197 = ssub.s32 %s25, %s32
      %s198 = sor.u32 %s196, %s197
      %p199 = scmp.eq.s32.totalorder %s198, 0
      %s201 = sadd.s32 %s200, 1
      %s202 = scalar_select %p199, %s200, %s201
      %p205 = pneg %p199
      %p206 = scmp.eq.s32.totalorder %s17, 1
      %p207 = por %p205, %p206
      %p208 = scmp.ne.s32.totalorder %s200, %s203
      %p209 = scmp.eq.s32.totalorder %s17, 0
      %p210 = por %p208, %p209
      %p211 = scmp.ne.s32.totalorder %s200, %s203
      %p212 = scmp.eq.s32.totalorder %s22, 1
      %p213 = por %p211, %p212
      %p214 = scmp.ne.s32.totalorder %s203, %s204
      %p215 = scmp.eq.s32.totalorder %s22, 0
      %p216 = por %p214, %p215
      %p217 = scmp.ne.s32.totalorder %s203, %s204
      %p218 = scmp.eq.s32.totalorder %s23, 1
      %p219 = por %p217, %p218
      %p221 = scmp.ne.s32.totalorder %s204, %s220
      %p222 = scmp.eq.s32.totalorder %s23, 0
      %p223 = por %p221, %p222
      %p224 = scmp.le.s32.totalorder 1, %s17
      %p225 = scmp.lt.s32.totalorder %s17, 3
      %p226 = pnand %p224, %p225
      %p227 = pneg %p226
      // Predicated region
      $region9: #{tpu_custom_call.1} parent=5 // pred_check
        _
      $region10: #{tpu_custom_call.1} parent=5 // pred_check_branch
        %229 = sbr.rel (%p226) target = $region12
      $region11: #{tpu_custom_call.1} parent=5 // pred_region
        %s230 = ssub.s32 %s17, 1
        // Predicated region
        $region13: #{tpu_custom_call.1} parent=11 // pred_check
          %p231 = pneg %p104
        $region14: #{tpu_custom_call.1} parent=11 // pred_check_branch
          %233 = sbr.rel (%p231) target = $region16
        $region15: #{tpu_custom_call.1} parent=11 // pred_region
          %s235 = ssub.s32 256, 256
          %236 = vsyncadd [#allocation3], %s235
          %s237 = sshll.u32 [#allocation2], 4
          %s238 = int_to_ptr.vmem [resolvable:$true] %s237
          %243 = dma.hbm_to_vmem [thread:$0]  %s2, 256, %s238, [#allocation3], 64, 64, 4
        $region16: #{tpu_custom_call.1} parent=11 // pred_fallthru
          _
        // Predicated region
        $region17: #{tpu_custom_call.1} parent=11 // pred_check
          %p244 = pneg %p125
        $region18: #{tpu_custom_call.1} parent=11 // pred_check_branch
          %246 = sbr.rel (%p244) target = $region20
        $region19: #{tpu_custom_call.1} parent=11 // pred_region
          _
        $region20: #{tpu_custom_call.1} parent=11 // pred_fallthru
          _
        // Predicated region
        $region21: #{tpu_custom_call.1} parent=11 // pred_check
          %p247 = pneg %p146
        $region22: #{tpu_custom_call.1} parent=11 // pred_check_branch
          %249 = sbr.rel (%p247) target = $region24
        $region23: #{tpu_custom_call.1} parent=11 // pred_region
          _
        $region24: #{tpu_custom_call.1} parent=11 // pred_fallthru
          _
        // Predicated region
        $region25: #{tpu_custom_call.1} parent=11 // pred_check
          %p250 = pneg %p167
        $region26: #{tpu_custom_call.1} parent=11 // pred_check_branch
          %252 = sbr.rel (%p250) target = $region28
        $region27: #{tpu_custom_call.1} parent=11 // pred_region
          _
        $region28: #{tpu_custom_call.1} parent=11 // pred_fallthru
          _
        // Predicated region
        $region29: #{tpu_custom_call.1} parent=11 // pred_check
          %p253 = pneg %p188
        $region30: #{tpu_custom_call.1} parent=11 // pred_check_branch
          %255 = sbr.rel (%p253) target = $region32
        $region31: #{tpu_custom_call.1} parent=11 // pred_region
          _
        $region32: #{tpu_custom_call.1} parent=11 // pred_fallthru
          _
      $region12: #{tpu_custom_call.1} parent=5 // pred_fallthru
        _
      %p256 = scmp.lt.s32.totalorder %s17, 2
      // Predicated region
      $region33: #{tpu_custom_call.1} parent=5 // pred_check
        %p257 = pneg %p256
      $region34: #{tpu_custom_call.1} parent=5 // pred_check_branch
        %259 = sbr.rel (%p257) target = $region36
      $region35: #{tpu_custom_call.1} parent=5 // pred_region
        // Predicated region
        $region37: #{tpu_custom_call.1} parent=35 // pred_check
          %p260 = pneg %p51
        $region38: #{tpu_custom_call.1} parent=35 // pred_check_branch
          %262 = sbr.rel (%p260) target = $region40
        $region39: #{tpu_custom_call.1} parent=35 // pred_region
          %s263 = smul.u32 2, %s25
          %p264 = scmp.lt.s32.totalorder %s24, 1
          %s265 = scalar_select %p264, %s24, 1
          %p266 = scmp.lt.s32.totalorder %s263, 1
          %s267 = scalar_select %p266, %s263, 1
          %s268 = smul.addr %s265, 8
          %s269 = sadd.s32 %s267, %s268
          %s270 = smul.addr %s269, 4
          %s271 = scalar_lea.vmem %s0, %s270
          %s272 = smul.u32 2, %s25
        $region40: #{tpu_custom_call.1} parent=35 // pred_fallthru
          _
        // Predicated region
        $region41: #{tpu_custom_call.1} parent=35 // pred_check
          %p273 = pneg %p77
        $region42: #{tpu_custom_call.1} parent=35 // pred_check_branch
          %275 = sbr.rel (%p273) target = $region44
        $region43: #{tpu_custom_call.1} parent=35 // pred_region
          %p276 = scmp.lt.s32.totalorder %s24, 1
          %s277 = scalar_select %p276, %s24, 1
          %s278 = smul.addr %s277, 4
          %s279 = smul.addr %s278, 8
          %s280 = scalar_lea.vmem %s1, %s279
        $region44: #{tpu_custom_call.1} parent=35 // pred_fallthru
          _
      $region36: #{tpu_custom_call.1} parent=5 // pred_fallthru
        _
      %p281 = scmp.le.s32.totalorder 1, %s17
      %p282 = scmp.lt.s32.totalorder %s17, 3
      %p283 = pnand %p281, %p282
      %p284 = pneg %p283
      // Predicated region
      $region45: #{tpu_custom_call.1} parent=5 // pred_check
        _
      $region46: #{tpu_custom_call.1} parent=5 // pred_check_branch
        %286 = sbr.rel (%p283) target = $region48
      $region47: #{tpu_custom_call.1} parent=5 // pred_region
        %s287 = ssub.s32 %s17, 1
        // Predicated region
        $region49: #{tpu_custom_call.1} parent=47 // pred_check
          %p288 = pneg %p104
        $region50: #{tpu_custom_call.1} parent=47 // pred_check_branch
          %290 = sbr.rel (%p288) target = $region52
        $region51: #{tpu_custom_call.1} parent=47 // pred_region
          %291 = dma.done [#allocation3], 256
        $region52: #{tpu_custom_call.1} parent=47 // pred_fallthru
          _
        %s292 = smul.u32 2, %s27
        %p293 = scmp.lt.s32.totalorder %s26, 1
        %s294 = scalar_select %p293, %s26, 1
        %p295 = scmp.lt.s32.totalorder %s292, 1
        %s296 = scalar_select %p295, %s292, 1
        %s297 = smul.addr %s294, 8
        %s298 = sadd.s32 %s296, %s297
        %s299 = smul.addr %s298, 4
        %s300 = scalar_lea.vmem %s0, %s299
        %p301 = pneg %p57
        %p302 = pneg %p54
        %p303 = scmp.lt.s32.totalorder %s26, 1
        %s304 = scalar_select %p303, %s26, 1
        %s305 = smul.addr %s304, 4
        %s306 = smul.addr %s305, 8
        %s307 = scalar_lea.vmem %s1, %s306
        %p308 = pneg %p83
        %p309 = pneg %p80
        %p310 = pneg %p104
        %p311 = pneg %p101
        %p312 = pneg %p125
        %p313 = pneg %p122
        %p314 = pneg %p146
        %p315 = pneg %p143
        %p316 = pneg %p167
        %p317 = pneg %p164
        %p318 = pneg %p188
        %p319 = pneg %p185
        %p320 = pneg %p216
        %p321 = pneg %p213
        %s322 = sand.u32 %s203, 1
        %s323 = scalar_lea.sflag [#allocation4], %s322
        %s324 = sand.u32 %s203, 1
        %s325 = smul.addr %s324, 4
        %s326 = scalar_lea.vmem [#allocation5], %s325
        %s327 = smul.u32 2, %s27
        %p328 = scmp.lt.s32.totalorder %s26, 1
        %s329 = scalar_select %p328, %s26, 1
        %p330 = scmp.lt.s32.totalorder %s327, 1
        %s331 = scalar_select %p330, %s327, 1
        %s332 = smul.addr %s329, 8
        %s333 = sadd.s32 %s331, %s332
        %s334 = smul.addr %s333, 4
        %s335 = scalar_lea.vmem %s0, %s334
        %s336 = smul.u32 2, %s27
        %p337 = scmp.lt.s32.totalorder %s26, 1
        %s338 = scalar_select %p337, %s26, 1
        %s339 = smul.addr %s338, 4
        %s340 = smul.addr %s339, 8
        %s341 = scalar_lea.vmem %s1, %s340
        %s342 = smul.u32 2, %s27
        %v344 = vld [vmem:[%s335] sm:$0xff]
        %v345 = vld [vmem:[%s335 + $0x8] sm:$0xff]
        %v346 = vld [vmem:[%s335 + $0x10] sm:$0xff]
        %v347 = vld [vmem:[%s335 + $0x18] sm:$0xff]
        %v348 = vld [vmem:[#allocation2] sm:$0xf]
        %v349 = vld [vmem:[#allocation2 + $0x4] sm:$0xf]
        %v350 = vld [vmem:[#allocation2 + $0x8] sm:$0xf]
        %v351 = vld [vmem:[#allocation2 + $0xc] sm:$0xf]
        %v352 = vld [vmem:[%s341] sm:$0xff]
        %v353 = vld [vmem:[%s341 + $0x8] sm:$0xff]
        %v354 = vld [vmem:[%s341 + $0x10] sm:$0xff]
        %v355 = vld [vmem:[%s341 + $0x18] sm:$0xff]
        %357 = vset.pattern.permute.xlu0 0
        %358 = vperm.xlu0 %357, %v352
        %v359 = vpop.permute.xlu0 %358
        %362 = vset.pattern.permute.xlu0 0
        %363 = vperm.xlu0 %362, %v353
        %v364 = vpop.permute.xlu0 %363
        %367 = vset.pattern.permute.xlu0 0
        %368 = vperm.xlu0 %367, %v354
        %v369 = vpop.permute.xlu0 %368
        %372 = vset.pattern.permute.xlu0 0
        %373 = vperm.xlu0 %372, %v355
        %v374 = vpop.permute.xlu0 %373
        %v380 = vunpack.c.l.b16 %v348
        %v381 = vunpack.c.l.b16 %v349
        %v382 = vunpack.c.l.b16 %v350
        %v383 = vunpack.c.l.b16 %v351
        %v384 = vpack.c.b16 %v381, %v380
        %v385 = vpack.c.b16 %v383, %v382
        %v390 = vunpack.c.l.b16 %v344
        %v391 = vunpack.c.h.b16 %v344
        %v392 = vunpack.c.l.b16 %v345
        %v393 = vunpack.c.h.b16 %v345
        %v394 = vunpack.c.l.b16 %v346
        %v395 = vunpack.c.h.b16 %v346
        %v396 = vunpack.c.l.b16 %v347
        %v397 = vunpack.c.h.b16 %v347
        %v398 = vpack.c.b16 %v392, %v390
        %v399 = vpack.c.b16 %v393, %v391
        %v400 = vpack.c.b16 %v396, %v394
        %v401 = vpack.c.b16 %v397, %v395
        %vm406 = vcmask 261120
        %v408 = vsel %vm406, %v384, 0
        %v411 = vsel %vm406, %v385, 0
        %413 = vmatprep.subr.bf16.mxu0 %v399
        %414 = vmatpush1.bf16.msra.mxu0 %v398
        %415 = vmatprep.subr.bf16.mxu0 %v401
        %416 = vmatpush1.bf16.msra.mxu0 %v400
        %417 = vmatprep.subr.bf16.mxu0 0
        %418 = vmatpush1.bf16.msra.mxu0 0
        %419 = vmatprep.subr.bf16.mxu0 0
        %420 = vmatpush1.bf16.msra.mxu0 0
        %421 = vmatprep.subr.bf16.mxu0 0
        %422 = vmatpush1.bf16.msra.mxu0 0
        %423 = vmatprep.subr.bf16.mxu0 0
        %424 = vmatpush1.bf16.msra.mxu0 0
        %425 = vmatprep.subr.bf16.mxu0 0
        %426 = vmatpush1.bf16.msra.mxu0 0
        %427 = vmatprep.subr.bf16.mxu0 0
        %428 = vmatpush1.bf16.msra.mxu0 0
        %429 = vmatprep.subr.bf16.mxu0 0
        %430 = vmatpush1.bf16.msra.mxu0 0
        %431 = vmatprep.subr.bf16.mxu0 0
        %432 = vmatpush1.bf16.msra.mxu0 0
        %433 = vmatprep.subr.bf16.mxu0 0
        %434 = vmatpush1.bf16.msra.mxu0 0
        %435 = vmatprep.subr.bf16.mxu0 0
        %436 = vmatpush1.bf16.msra.mxu0 0
        %437 = vmatprep.subr.bf16.mxu0 0
        %438 = vmatpush1.bf16.msra.mxu0 0
        %439 = vmatprep.subr.bf16.mxu0 0
        %440 = vmatpush1.bf16.msra.mxu0 0
        %441 = vmatprep.subr.bf16.mxu0 0
        %442 = vmatpush1.bf16.msra.mxu0 0
        %443 = vmatprep.subr.bf16.mxu0 0
        %444 = vmatpush1.bf16.msra.mxu0 0
        %445 = vmatprep.mubr.bf16.mxu0 0
        %446 = vmatmul.mubr.bf16.gmra.mrb[0].mxu0 %v408
        %v447 = vpop.f32.mrb[0].mxu0
        %v448 = vadd.f32 %v359, %v447
        %v449 = vpop.f32.mrb[0].mxu0
        %v450 = vadd.f32 %v359, %v449
        %v451 = vpop.f32.mrb[0].mxu0
        %v452 = vadd.f32 %v364, %v451
        %v453 = vpop.f32.mrb[0].mxu0
        %v454 = vadd.f32 %v364, %v453
        %455 = vmatprep.mubr.bf16.mxu0 0
        %456 = vmatmul.mubr.bf16.gmra.mrb[0].mxu0 %v411
        %v457 = vpop.f32.mrb[0].mxu0
        %v458 = vadd.f32 %v369, %v457
        %v459 = vpop.f32.mrb[0].mxu0
        %v460 = vadd.f32 %v369, %v459
        %v461 = vpop.f32.mrb[0].mxu0
        %v462 = vadd.f32 %v374, %v461
        %v463 = vpop.f32.mrb[0].mxu0
        %v464 = vadd.f32 %v374, %v463
        %465 = vdwg.mxu0
        %v466 = vmax.f32 %v448, 0.0
        %v467 = vmax.f32 %v450, 0.0
        %v468 = vmax.f32 %v452, 0.0
        %v469 = vmax.f32 %v454, 0.0
        %v470 = vmax.f32 %v458, 0.0
        %v471 = vmax.f32 %v460, 0.0
        %v472 = vmax.f32 %v462, 0.0
        %v473 = vmax.f32 %v464, 0.0
        %v474 = vld [vmem:[%s3] sm:$0xff]
        %v475 = vld [vmem:[%s3 + $0x8] sm:$0xff]
        %v476 = vld [vmem:[%s3 + $0x10] sm:$0xff]
        %v477 = vld [vmem:[%s3 + $0x18] sm:$0xff]
        %v478 = vld [vmem:[%s4] sm:$0xff]
        %v479 = vld [vmem:[%s4 + $0x8] sm:$0xff]
        %v480 = vld [vmem:[%s4 + $0x10] sm:$0xff]
        %v481 = vld [vmem:[%s4 + $0x18] sm:$0xff]
        %483 = vset.pattern.permute.xlu0 0
        %484 = vperm.xlu0 %483, %v478
        %v485 = vpop.permute.xlu0 %484
        %488 = vset.pattern.permute.xlu0 0
        %489 = vperm.xlu0 %488, %v479
        %v490 = vpop.permute.xlu0 %489
        %493 = vset.pattern.permute.xlu0 0
        %494 = vperm.xlu0 %493, %v480
        %v495 = vpop.permute.xlu0 %494
        %498 = vset.pattern.permute.xlu0 0
        %499 = vperm.xlu0 %498, %v481
        %v500 = vpop.permute.xlu0 %499
        %v503 = vsel %vm406, %v474, 0
        %v506 = vsel %vm406, %v475, 0
        %v509 = vsel %vm406, %v476, 0
        %v512 = vsel %vm406, %v477, 0
        %514 = vmatprep.subr.mxu0 %v467
        %515 = vmatpush1.msra.mxu0 %v466
        %516 = vmatprep.subr.mxu0 %v469
        %517 = vmatpush1.msra.mxu0 %v468
        %518 = vmatprep.subr.mxu0 %v471
        %519 = vmatpush1.msra.mxu0 %v470
        %520 = vmatprep.subr.mxu0 %v473
        %521 = vmatpush1.msra.mxu0 %v472
        %522 = vmatprep.subr.mxu0 0.0
        %523 = vmatpush1.msra.mxu0 0.0
        %524 = vmatprep.subr.mxu0 0.0
        %525 = vmatpush1.msra.mxu0 0.0
        %526 = vmatprep.subr.mxu0 0.0
        %527 = vmatpush1.msra.mxu0 0.0
        %528 = vmatprep.subr.mxu0 0.0
        %529 = vmatpush1.msra.mxu0 0.0
        %530 = vmatprep.subr.mxu0 0.0
        %531 = vmatpush1.msra.mxu0 0.0
        %532 = vmatprep.subr.mxu0 0.0
        %533 = vmatpush1.msra.mxu0 0.0
        %534 = vmatprep.subr.mxu0 0.0
        %535 = vmatpush1.msra.mxu0 0.0
        %536 = vmatprep.subr.mxu0 0.0
        %537 = vmatpush1.msra.mxu0 0.0
        %538 = vmatprep.subr.mxu0 0.0
        %539 = vmatpush1.msra.mxu0 0.0
        %540 = vmatprep.subr.mxu0 0.0
        %541 = vmatpush1.msra.mxu0 0.0
        %542 = vmatprep.subr.mxu0 0.0
        %543 = vmatpush1.msra.mxu0 0.0
        %544 = vmatprep.subr.mxu0 0.0
        %545 = vmatpush1.msra.mxu0 0.0
        %546 = vmatprep.subr.mxu0 0.0
        %547 = vmatpush1.msra.mxu0 0.0
        %548 = vmatprep.subr.mxu0 0.0
        %549 = vmatpush1.msra.mxu0 0.0
        %550 = vmatprep.subr.mxu0 0.0
        %551 = vmatpush1.msra.mxu0 0.0
        %552 = vmatprep.subr.mxu0 0.0
        %553 = vmatpush1.msra.mxu0 0.0
        %554 = vmatprep.subr.mxu0 0.0
        %555 = vmatpush1.msra.mxu0 0.0
        %556 = vmatprep.subr.mxu0 0.0
        %557 = vmatpush1.msra.mxu0 0.0
        %558 = vmatprep.subr.mxu0 0.0
        %559 = vmatpush1.msra.mxu0 0.0
        %560 = vmatprep.subr.mxu0 0.0
        %561 = vmatpush1.msra.mxu0 0.0
        %562 = vmatprep.subr.mxu0 0.0
        %563 = vmatpush1.msra.mxu0 0.0
        %564 = vmatprep.subr.mxu0 0.0
        %565 = vmatpush1.msra.mxu0 0.0
        %566 = vmatprep.subr.mxu0 0.0
        %567 = vmatpush1.msra.mxu0 0.0
        %568 = vmatprep.subr.mxu0 0.0
        %569 = vmatpush1.msra.mxu0 0.0
        %570 = vmatprep.subr.mxu0 0.0
        %571 = vmatpush1.msra.mxu0 0.0
        %572 = vmatprep.subr.mxu0 0.0
        %573 = vmatpush1.msra.mxu0 0.0
        %574 = vmatprep.subr.mxu0 0.0
        %575 = vmatpush1.msra.mxu0 0.0
        %576 = vmatprep.subr.mxu0 0.0
        %577 = vmatpush1.msra.mxu0 0.0
        %578 = vmatprep.mubr.f32.mxu0 0.0
        %579 = vmatmul.mubr.f32.gmra.mrb[0].mxu0 %v503
        %v580 = vpop.f32.mrb[0].mxu0
        %v581 = vadd.f32 %v485, %v580
        %v582 = vpop.f32.mrb[0].mxu0
        %v583 = vadd.f32 %v485, %v582
        %584 = vmatprep.mubr.f32.mxu0 0.0
        %585 = vmatmul.mubr.f32.gmra.mrb[0].mxu0 %v506
        %v586 = vpop.f32.mrb[0].mxu0
        %v587 = vadd.f32 %v490, %v586
        %v588 = vpop.f32.mrb[0].mxu0
        %v589 = vadd.f32 %v490, %v588
        %590 = vmatprep.mubr.f32.mxu0 0.0
        %591 = vmatmul.mubr.f32.gmra.mrb[0].mxu0 %v509
        %v592 = vpop.f32.mrb[0].mxu0
        %v593 = vadd.f32 %v495, %v592
        %v594 = vpop.f32.mrb[0].mxu0
        %v595 = vadd.f32 %v495, %v594
        %596 = vmatprep.mubr.f32.mxu0 0.0
        %597 = vmatmul.mubr.f32.gmra.mrb[0].mxu0 %v512
        %v598 = vpop.f32.mrb[0].mxu0
        %v599 = vadd.f32 %v500, %v598
        %v600 = vpop.f32.mrb[0].mxu0
        %v601 = vadd.f32 %v500, %v600
        %602 = vdwg.mxu0
        %v603 = vmax.f32 %v581, 0.0
        %v604 = vmax.f32 %v583, 0.0
        %v605 = vmax.f32 %v587, 0.0
        %v606 = vmax.f32 %v589, 0.0
        %v607 = vmax.f32 %v593, 0.0
        %v608 = vmax.f32 %v595, 0.0
        %v609 = vmax.f32 %v599, 0.0
        %v610 = vmax.f32 %v601, 0.0
        %v611 = vld [vmem:[%s5] sm:$0xf]
        %v612 = vld [vmem:[%s6] sm:$0xf]
        %614 = vset.pattern.permute.xlu0 0
        %615 = vperm.xlu0 %614, %v612
        %v616 = vpop.permute.xlu0 %615
        %v619 = vsel %vm406, %v611, 0
        %621 = vmatprep.subr.mxu0 %v604
        %622 = vmatpush1.msra.mxu0 %v603
        %623 = vmatprep.subr.mxu0 %v606
        %624 = vmatpush1.msra.mxu0 %v605
        %625 = vmatprep.subr.mxu0 %v608
        %626 = vmatpush1.msra.mxu0 %v607
        %627 = vmatprep.subr.mxu0 %v610
        %628 = vmatpush1.msra.mxu0 %v609
        %629 = vmatprep.subr.mxu0 0.0
        %630 = vmatpush1.msra.mxu0 0.0
        %631 = vmatprep.subr.mxu0 0.0
        %632 = vmatpush1.msra.mxu0 0.0
        %633 = vmatprep.subr.mxu0 0.0
        %634 = vmatpush1.msra.mxu0 0.0
        %635 = vmatprep.subr.mxu0 0.0
        %636 = vmatpush1.msra.mxu0 0.0
        %637 = vmatprep.subr.mxu0 0.0
        %638 = vmatpush1.msra.mxu0 0.0
        %639 = vmatprep.subr.mxu0 0.0
        %640 = vmatpush1.msra.mxu0 0.0
        %641 = vmatprep.subr.mxu0 0.0
        %642 = vmatpush1.msra.mxu0 0.0
        %643 = vmatprep.subr.mxu0 0.0
        %644 = vmatpush1.msra.mxu0 0.0
        %645 = vmatprep.subr.mxu0 0.0
        %646 = vmatpush1.msra.mxu0 0.0
        %647 = vmatprep.subr.mxu0 0.0
        %648 = vmatpush1.msra.mxu0 0.0
        %649 = vmatprep.subr.mxu0 0.0
        %650 = vmatpush1.msra.mxu0 0.0
        %651 = vmatprep.subr.mxu0 0.0
        %652 = vmatpush1.msra.mxu0 0.0
        %653 = vmatprep.subr.mxu0 0.0
        %654 = vmatpush1.msra.mxu0 0.0
        %655 = vmatprep.subr.mxu0 0.0
        %656 = vmatpush1.msra.mxu0 0.0
        %657 = vmatprep.subr.mxu0 0.0
        %658 = vmatpush1.msra.mxu0 0.0
        %659 = vmatprep.subr.mxu0 0.0
        %660 = vmatpush1.msra.mxu0 0.0
        %661 = vmatprep.subr.mxu0 0.0
        %662 = vmatpush1.msra.mxu0 0.0
        %663 = vmatprep.subr.mxu0 0.0
        %664 = vmatpush1.msra.mxu0 0.0
        %665 = vmatprep.subr.mxu0 0.0
        %666 = vmatpush1.msra.mxu0 0.0
        %667 = vmatprep.subr.mxu0 0.0
        %668 = vmatpush1.msra.mxu0 0.0
        %669 = vmatprep.subr.mxu0 0.0
        %670 = vmatpush1.msra.mxu0 0.0
        %671 = vmatprep.subr.mxu0 0.0
        %672 = vmatpush1.msra.mxu0 0.0
        %673 = vmatprep.subr.mxu0 0.0
        %674 = vmatpush1.msra.mxu0 0.0
        %675 = vmatprep.subr.mxu0 0.0
        %676 = vmatpush1.msra.mxu0 0.0
        %677 = vmatprep.subr.mxu0 0.0
        %678 = vmatpush1.msra.mxu0 0.0
        %679 = vmatprep.subr.mxu0 0.0
        %680 = vmatpush1.msra.mxu0 0.0
        %681 = vmatprep.subr.mxu0 0.0
        %682 = vmatpush1.msra.mxu0 0.0
        %683 = vmatprep.subr.mxu0 0.0
        %684 = vmatpush1.msra.mxu0 0.0
        %685 = vmatprep.mubr.f32.mxu0 0.0
        %686 = vmatmul.mubr.f32.gmra.mrb[0].mxu0 %v619
        %v687 = vpop.f32.mrb[0].mxu0
        %v688 = vadd.f32 %v616, %v687
        %v689 = vpop.f32.mrb[0].mxu0
        %v690 = vadd.f32 %v616, %v689
        %691 = vdwg.mxu0
        %v692 = vpack.c.bf16 %v688, %v688
        %v693 = vpack.c.bf16 %v690, %v690
        %v696 = vcombine.low %v692, %v693
        %v698 = vunpack.c.l.s4 1983009808
        %v699 = vunpack.c.0.s8 %v698
        %v700 = vlaneseq
        %v701 = vshrl.u32 %v700, 7
        %v702 = vsub.s32 %v699, %v701
        %v703 = vrot.slane %v696, %v702
        %705 = vst [vmem:[%s326] sm:$0xf] %v703
        %s706 = sand.u32 %s203, 1
        %s707 = scalar_lea.sflag [#allocation4], %s706
        %s708 = sand.u32 %s203, 1
        %s709 = smul.addr %s708, 4
        %s710 = scalar_lea.vmem [#allocation5], %s709
        // Predicated region
        $region53: #{tpu_custom_call.1} parent=47 // pred_check
          %p711 = pneg %p213
        $region54: #{tpu_custom_call.1} parent=47 // pred_check_branch
          %713 = sbr.rel (%p711) target = $region56
        $region55: #{tpu_custom_call.1} parent=47 // pred_region
          %s714 = smul.u32 2, %s27
          %s716 = ssub.s32 64, 64
          %717 = vsyncadd %s707, %s716
          %s718 = smul.addr %s26, 2
          %s719 = sadd.s32 %s714, %s718
          %s720 = smul.addr %s719, 32
          %s721 = scalar_lea.hbm %s7, %s720
          %s723 = sshll.u32 %s710, 4
          %s724 = int_to_ptr.vmem [resolvable:$true] %s723
          %726 = dma.vmem_to_hbm [thread:$0]  %s724, 64, %s721, %s707
        $region56: #{tpu_custom_call.1} parent=47 // pred_fallthru
          _
      $region48: #{tpu_custom_call.1} parent=5 // pred_fallthru
        _
      %p727 = scmp.le.s32.totalorder 2, %s17
      // Predicated region
      $region57: #{tpu_custom_call.1} parent=5 // pred_check
        %p728 = pneg %p727
      $region58: #{tpu_custom_call.1} parent=5 // pred_check_branch
        %730 = sbr.rel (%p728) target = $region60
      $region59: #{tpu_custom_call.1} parent=5 // pred_region
        %s731 = ssub.s32 %s17, 2
        // Predicated region
        $region61: #{tpu_custom_call.1} parent=59 // pred_check
          %p732 = pneg %p219
        $region62: #{tpu_custom_call.1} parent=59 // pred_check_branch
          %734 = sbr.rel (%p732) target = $region64
        $region63: #{tpu_custom_call.1} parent=59 // pred_region
          %s735 = sand.u32 %s204, 1
          %s736 = scalar_lea.sflag [#allocation4], %s735
          %s737 = sand.u32 %s204, 1
          %s738 = smul.addr %s737, 4
          %s739 = scalar_lea.vmem [#allocation5], %s738
          %740 = dma.done %s736, 64
        $region64: #{tpu_custom_call.1} parent=59 // pred_fallthru
          _
      $region60: #{tpu_custom_call.1} parent=5 // pred_fallthru
        _
    $region6: #{tpu_custom_call.1} parent=1 // loop_footer
      %s21 = sadd.s32 1, %s17
    $region7: #{tpu_custom_call.1} parent=1 // loop_footer_branch
      %16 = sbr.rel target = $region3
    $region8: #{tpu_custom_call.1} parent=1 // loop_exit
      _
    %741 = vsyncpa [#allocation3], 1
    %s742 = scalar_lea.sflag [#allocation3], 1
    %743 = vsyncpa %s742, 1
    %744 = vsyncpa [#allocation4], 1
    %s745 = scalar_lea.sflag [#allocation4], 1
    %746 = vsyncpa %s745, 1

</llo_original>
